<compile_context>
chip_gen: v5e
topology: v5e:2x2
jax: 0.10.0
libtpu: 0.0.40
codegen_flags: <defaults>
</compile_context>

<pallas_src>
import math

import jax
import jax.numpy as jnp
import numpy as np
from jax import lax
from jax.experimental import pallas as pl
from jax.experimental.pallas import tpu as pltpu


# ----------------------------------------------------------------------------
# Wrapper: builds the kernel (closed over static dims) and calls pallas_call.
# ----------------------------------------------------------------------------
def multi_head_attention(query, key, value, w_q, w_k, w_v, w_o,
                         rel_embeddings, max_relative_pos):
    """query/key/value: [T, B, d_model] (PyTorch layout). Returns [T, B, d_model]."""
    T, B, F = query.shape
    H, _, D = w_q.shape
    M = 2 * T - 1
    G = B * H
    # TODO(synk): length > max_relative_pos (-1e8 clamping of out-of-range
    # relative positions) not implemented; assume T <= max_relative_pos.
    assert T <= max_relative_pos

    # --- parameter layout plumbing (hoistable; cache at param-load time) ---
    start = max_relative_pos - T
    rel_used = rel_embeddings[:, start:start + M, :, 0]          # [H, M, D]
    relt = jnp.transpose(rel_used, (0, 2, 1))                    # [H, D, M]
    relt_g = jnp.broadcast_to(relt[None], (B, H, D, M)).reshape(G, D, M)

    wq_s = jnp.transpose(w_q, (1, 0, 2)).reshape(F, H * D)       # [F, H*D]
    wk_s = jnp.transpose(w_k, (1, 0, 2)).reshape(F, H * D)
    wv_s = jnp.transpose(w_v, (1, 0, 2)).reshape(F, H * D)
    wo_s = w_o.reshape(H * D, F)                                 # [H*D, F]

    # [T,B,F] -> [T*B,F] is a contiguous row-major view: no transpose, no
    # extra HBM pass (row index = t*B + b).
    xq = query.reshape(T * B, F)
    xk = key.reshape(T * B, F)
    xv = value.reshape(T * B, F)

    inv_sqrt_d = 1.0 / math.sqrt(D)

    def kernel(xq_ref, xk_ref, xv_ref, wq_ref, wk_ref, wv_ref, wo_ref,
               relt_ref, out_ref):
        # Fused projections: full-width MXU matmuls over all batch rows.
        q = jnp.dot(xq_ref[...], wq_ref[...], preferred_element_type=jnp.float32)
        k = jnp.dot(xk_ref[...], wk_ref[...], preferred_element_type=jnp.float32)
        v = jnp.dot(xv_ref[...], wv_ref[...], preferred_element_type=jnp.float32)

        def split_heads(x):                       # [T*B, H*D] -> [G=B*H, T, D]
            x = x.reshape(T, B, H, D)
            return jnp.transpose(x, (1, 2, 0, 3)).reshape(G, T, D)

        qg, kg, vg = split_heads(q), split_heads(k), split_heads(v)

        # Content logits, batched over (batch, head) on the leading dim.
        logits = lax.dot_general(qg, kg, (((2,), (2,)), ((0,), (0,))),
                                 preferred_element_type=jnp.float32)   # [G,T,T]
        logits = logits * jnp.float32(inv_sqrt_d)

        # Relative positional logits: rel[g, i, m] = q_g[i] . rel_g[:, m]
        rel = lax.dot_general(qg, relt_ref[...], (((2,), (1,)), ((0,), (0,))),
                              preferred_element_type=jnp.float32)      # [G,T,M]

        # Relative -> absolute indexing ("skew"): pos[g,i,j] = rel[g,i,T-1+j-i]
        # done as T static slices concatenated once (no scratch, no masked
        # stores).  TODO(synk): single strided pltpu.roll on hardware.
        pos = jnp.concatenate(
            [lax.slice(rel, (0, i, T - 1 - i), (G, i + 1, 2 * T - 1 - i))
             for i in range(T)], axis=1)                               # [G,T,T]

        logits = logits + pos
        # TODO(synk): tgt_mask / key_padding masks not supported (forward is
        # called with None for all masks in this setup).

        # Softmax over keys — exact division (no approx reciprocal).
        mx = jnp.max(logits, axis=-1, keepdims=True)
        ex = jnp.exp(logits - mx)
        probs = ex / jnp.sum(ex, axis=-1, keepdims=True)
        # dropout: eval-mode identity (nn.Dropout only active in training).

        # attention * V, batched over (batch, head)
        o = lax.dot_general(probs, vg, (((2,), (1,)), ((0,), (0,))),
                            preferred_element_type=jnp.float32)        # [G,T,D]

        # Merge heads back to [T*B, H*D] (values stay in registers), then one
        # full-width output projection.
        o = jnp.transpose(o.reshape(B, H, T, D), (2, 0, 1, 3)).reshape(T * B, H * D)
        out = jnp.dot(o, wo_ref[...], preferred_element_type=jnp.float32)
        out_ref[...] = out.astype(out_ref.dtype)

    out_flat = pl.pallas_call(
        kernel,
        out_shape=jax.ShapeDtypeStruct((T * B, F), query.dtype),
        grid_spec=pltpu.PrefetchScalarGridSpec(
            num_scalar_prefetch=0,
            grid=(1,),   # whole (tiny) batch folded into one step; weights resident
            in_specs=[
                pl.BlockSpec((T * B, F), lambda i: (0, 0)),      # xq
                pl.BlockSpec((T * B, F), lambda i: (0, 0)),      # xk
                pl.BlockSpec((T * B, F), lambda i: (0, 0)),      # xv
                pl.BlockSpec((F, H * D), lambda i: (0, 0)),      # wq (resident)
                pl.BlockSpec((F, H * D), lambda i: (0, 0)),      # wk (resident)
                pl.BlockSpec((F, H * D), lambda i: (0, 0)),      # wv (resident)
                pl.BlockSpec((H * D, F), lambda i: (0, 0)),      # wo (resident)
                pl.BlockSpec((G, D, M), lambda i: (0, 0, 0)),    # rel emb (resident)
            ],
            out_specs=pl.BlockSpec((T * B, F), lambda i: (0, 0)),
        ),
        compiler_params=pltpu.CompilerParams(
            dimension_semantics=("arbitrary",),
            vmem_limit_bytes=32 * 1024 * 1024),
    )(xq, xk, xv, wq_s, wk_s, wv_s, wo_s, relt_g)

    return out_flat.reshape(T, B, F)   # free view back to [T, B, d_model]


# ----------------------------------------------------------------------------
# Pure-JAX reference (mirrors the PyTorch forward, incl. pad/reshape rel->abs)
# ----------------------------------------------------------------------------
def mha_reference(query, key, value, w_q, w_k, w_v, w_o,
                  rel_embeddings, max_relative_pos):
    T, B, F = query.shape
    H, _, D = w_q.shape
    q = jnp.einsum('tbf,hfa->bhta', query, w_q)
    k = jnp.einsum('tbf,hfa->bhta', key, w_k)
    v = jnp.einsum('tbf,hfa->bhta', value, w_v)
    logits = jnp.einsum('bhqa,bhka->bhqk', q, k) / (D ** 0.5)

    start = max_relative_pos - T
    used = rel_embeddings[:, start:start + 2 * T - 1, :, 0]           # [H, 2T-1, D]
    q_pos = jnp.transpose(q, (2, 0, 1, 3))                            # [T, B, H, D]
    rel_logits = jnp.einsum('lbhd,hmd->lbhm', q_pos, used)            # [T, B, H, 2T-1]
    x = rel_logits.reshape(T, B * H, 2 * T - 1)
    # relative_to_absolute_indexing (unmasked)
    x = jnp.pad(x, ((0, 0), (0, 0), (0, 1)))
    x = jnp.transpose(x, (1, 0, 2)).reshape(B * H, T * 2 * T)
    x = jnp.pad(x, ((0, 0), (0, T - 1)))
    x = x.reshape(B * H, T + 1, 2 * T - 1)
    pos = x[:, :T, T - 1:]                                            # [B*H, T, T]
    logits = logits + pos.reshape(B, H, T, T)

    probs = jax.nn.softmax(logits, axis=-1)
    o = jnp.einsum('bhqk,bhka->bhqa', probs, v)
    return jnp.einsum('bhta,haf->tbf', o, w_o)


# ----------------------------------------------------------------------------
if __name__ == "__main__":
    # small shapes consistent with the module
    T, B = 8, 2
    d_model, n_head = 32, 4
    d_qkv = d_model // n_head
    max_rel = 16          # relative_positional_distance (kept small; T <= max_rel)

    key = jax.random.PRNGKey(0)
    kq, kk, kv, k1, k2, k3, k4, k5 = jax.random.split(key, 8)

    query = jax.random.normal(kq, (T, B, d_model), dtype=jnp.float32)
    key_t = jax.random.normal(kk, (T, B, d_model), dtype=jnp.float32)
    value = jax.random.normal(kv, (T, B, d_model), dtype=jnp.float32)

    # deterministic parameter init (xavier-normal-like std for projections)
    xav = math.sqrt(2.0 / (d_model + d_qkv))
    w_q = xav * jax.random.normal(k1, (n_head, d_model, d_qkv), dtype=jnp.float32)
    w_k = xav * jax.random.normal(k2, (n_head, d_model, d_qkv), dtype=jnp.float32)
    w_v = xav * jax.random.normal(k3, (n_head, d_model, d_qkv), dtype=jnp.float32)
    w_o = xav * jax.random.normal(k4, (n_head, d_qkv, d_model), dtype=jnp.float32)
    # LearnedRelativePositionalEmbedding params: [H, 2*max_rel-1, d_qkv, 1]
    rel_emb = (d_qkv ** -0.5) * jax.random.normal(
        k5, (n_head, 2 * max_rel - 1, d_qkv, 1), dtype=jnp.float32)

    out = multi_head_attention(query, key_t, value, w_q, w_k, w_v, w_o,
                               rel_emb, max_rel)
    out = jax.block_until_ready(out)

    ref = mha_reference(query, key_t, value, w_q, w_k, w_v, w_o,
                        rel_emb, max_rel)
    ref = jax.block_until_ready(ref)

    assert out.shape == (T, B, d_model)
    # fp32 everywhere, exact softmax division; tolerance only needs to cover
    # MXU-vs-XLA contraction-order rounding (well below the previous ~1e-2
    # approx-reciprocal error, which this version eliminates).
    np.testing.assert_allclose(np.asarray(out), np.asarray(ref),
                               rtol=5e-3, atol=5e-3)
    print("KERNEL_OK")
</pallas_src>

<mosaic_0001>
module attributes {stable_mosaic.version = 11 : i64} {
  func.func @kernel(%arg0: i32, %arg1: memref<16x32xf32, #tpu.memory_space<vmem>>, %arg2: memref<16x32xf32, #tpu.memory_space<vmem>>, %arg3: memref<16x32xf32, #tpu.memory_space<vmem>>, %arg4: memref<32x32xf32, #tpu.memory_space<vmem>>, %arg5: memref<32x32xf32, #tpu.memory_space<vmem>>, %arg6: memref<32x32xf32, #tpu.memory_space<vmem>>, %arg7: memref<32x32xf32, #tpu.memory_space<vmem>>, %arg8: memref<8x8x15xf32, #tpu.memory_space<vmem>>, %arg9: memref<16x32xf32, #tpu.memory_space<vmem>>) attributes {dimension_semantics = [#tpu.dimension_semantics<arbitrary>], iteration_bounds = array<i64: 1>, scalar_prefetch = 0 : i64, scratch_operands = 0 : i64, tpu.core_type = #tpu.core_type<tc>, window_params = [{pipeline_mode = #tpu.pipeline_mode<synchronous>, transform_indices = @transform_0, window_bounds = array<i64: 16, 32>}, {pipeline_mode = #tpu.pipeline_mode<synchronous>, transform_indices = @transform_1, window_bounds = array<i64: 16, 32>}, {pipeline_mode = #tpu.pipeline_mode<synchronous>, transform_indices = @transform_2, window_bounds = array<i64: 16, 32>}, {pipeline_mode = #tpu.pipeline_mode<synchronous>, transform_indices = @transform_3, window_bounds = array<i64: 32, 32>}, {pipeline_mode = #tpu.pipeline_mode<synchronous>, transform_indices = @transform_4, window_bounds = array<i64: 32, 32>}, {pipeline_mode = #tpu.pipeline_mode<synchronous>, transform_indices = @transform_5, window_bounds = array<i64: 32, 32>}, {pipeline_mode = #tpu.pipeline_mode<synchronous>, transform_indices = @transform_6, window_bounds = array<i64: 32, 32>}, {pipeline_mode = #tpu.pipeline_mode<synchronous>, transform_indices = @transform_7, window_bounds = array<i64: 8, 8, 15>}, {pipeline_mode = #tpu.pipeline_mode<synchronous>, transform_indices = @transform_8, window_bounds = array<i64: 16, 32>}]} {
    %c0 = arith.constant 0 : index
    %c0_0 = arith.constant 0 : index
    %0 = vector.load %arg1[%c0, %c0_0] : memref<16x32xf32, #tpu.memory_space<vmem>>, vector<16x32xf32>
    %c0_1 = arith.constant 0 : index
    %c0_2 = arith.constant 0 : index
    %1 = vector.load %arg4[%c0_1, %c0_2] : memref<32x32xf32, #tpu.memory_space<vmem>>, vector<32x32xf32>
    %cst = arith.constant dense<0.000000e+00> : vector<16x32xf32>
    %2 = tpu.matmul %0, %1, %cst {dimension_numbers = #tpu.dot_dimension_numbers<[1], [0], [0], [1], [0, 0, 1, 1], [], []>} : vector<16x32xf32>, vector<32x32xf32>, vector<16x32xf32> -> vector<16x32xf32>
    %c0_3 = arith.constant 0 : index
    %c0_4 = arith.constant 0 : index
    %3 = vector.load %arg2[%c0_3, %c0_4] : memref<16x32xf32, #tpu.memory_space<vmem>>, vector<16x32xf32>
    %c0_5 = arith.constant 0 : index
    %c0_6 = arith.constant 0 : index
    %4 = vector.load %arg5[%c0_5, %c0_6] : memref<32x32xf32, #tpu.memory_space<vmem>>, vector<32x32xf32>
    %cst_7 = arith.constant dense<0.000000e+00> : vector<16x32xf32>
    %5 = tpu.matmul %3, %4, %cst_7 {dimension_numbers = #tpu.dot_dimension_numbers<[1], [0], [0], [1], [0, 0, 1, 1], [], []>} : vector<16x32xf32>, vector<32x32xf32>, vector<16x32xf32> -> vector<16x32xf32>
    %c0_8 = arith.constant 0 : index
    %c0_9 = arith.constant 0 : index
    %6 = vector.load %arg3[%c0_8, %c0_9] : memref<16x32xf32, #tpu.memory_space<vmem>>, vector<16x32xf32>
    %c0_10 = arith.constant 0 : index
    %c0_11 = arith.constant 0 : index
    %7 = vector.load %arg6[%c0_10, %c0_11] : memref<32x32xf32, #tpu.memory_space<vmem>>, vector<32x32xf32>
    %cst_12 = arith.constant dense<0.000000e+00> : vector<16x32xf32>
    %8 = tpu.matmul %6, %7, %cst_12 {dimension_numbers = #tpu.dot_dimension_numbers<[1], [0], [0], [1], [0, 0, 1, 1], [], []>} : vector<16x32xf32>, vector<32x32xf32>, vector<16x32xf32> -> vector<16x32xf32>
    %9 = vector.shape_cast %2 : vector<16x32xf32> to vector<8x2x4x8xf32>
    %10 = tpu.transpose %9, [1, 2, 0, 3] : vector<8x2x4x8xf32> -> vector<2x4x8x8xf32>
    %11 = vector.shape_cast %10 : vector<2x4x8x8xf32> to vector<8x8x8xf32>
    %12 = vector.shape_cast %5 : vector<16x32xf32> to vector<8x2x4x8xf32>
    %13 = tpu.transpose %12, [1, 2, 0, 3] : vector<8x2x4x8xf32> -> vector<2x4x8x8xf32>
    %14 = vector.shape_cast %13 : vector<2x4x8x8xf32> to vector<8x8x8xf32>
    %15 = vector.shape_cast %8 : vector<16x32xf32> to vector<8x2x4x8xf32>
    %16 = tpu.transpose %15, [1, 2, 0, 3] : vector<8x2x4x8xf32> -> vector<2x4x8x8xf32>
    %17 = vector.shape_cast %16 : vector<2x4x8x8xf32> to vector<8x8x8xf32>
    %cst_13 = arith.constant dense<0.000000e+00> : vector<8x8x8xf32>
    %18 = tpu.matmul %11, %14, %cst_13 {dimension_numbers = #tpu.dot_dimension_numbers<[2], [2], [1], [1], [0, 0, 0, 1, 1, 1], [0], [0]>} : vector<8x8x8xf32>, vector<8x8x8xf32>, vector<8x8x8xf32> -> vector<8x8x8xf32>
    %cst_14 = arith.constant 0.353553385 : f32
    %19 = vector.broadcast %cst_14 : f32 to vector<8x8x8xf32>
    %20 = arith.mulf %18, %19 : vector<8x8x8xf32>
    %c0_15 = arith.constant 0 : index
    %c0_16 = arith.constant 0 : index
    %c0_17 = arith.constant 0 : index
    %21 = vector.load %arg8[%c0_15, %c0_16, %c0_17] : memref<8x8x15xf32, #tpu.memory_space<vmem>>, vector<8x8x15xf32>
    %cst_18 = arith.constant dense<0.000000e+00> : vector<8x8x15xf32>
    %22 = tpu.matmul %11, %21, %cst_18 {dimension_numbers = #tpu.dot_dimension_numbers<[2], [1], [1], [2], [0, 0, 0, 1, 1, 2], [0], [0]>} : vector<8x8x8xf32>, vector<8x8x15xf32>, vector<8x8x15xf32> -> vector<8x8x15xf32>
    %23 = vector.extract_strided_slice %22 {offsets = [0, 0, 7], sizes = [8, 1, 8], strides = [1, 1, 1]} : vector<8x8x15xf32> to vector<8x1x8xf32>
    %24 = vector.extract_strided_slice %22 {offsets = [0, 1, 6], sizes = [8, 1, 8], strides = [1, 1, 1]} : vector<8x8x15xf32> to vector<8x1x8xf32>
    %25 = vector.extract_strided_slice %22 {offsets = [0, 2, 5], sizes = [8, 1, 8], strides = [1, 1, 1]} : vector<8x8x15xf32> to vector<8x1x8xf32>
    %26 = vector.extract_strided_slice %22 {offsets = [0, 3, 4], sizes = [8, 1, 8], strides = [1, 1, 1]} : vector<8x8x15xf32> to vector<8x1x8xf32>
    %27 = vector.extract_strided_slice %22 {offsets = [0, 4, 3], sizes = [8, 1, 8], strides = [1, 1, 1]} : vector<8x8x15xf32> to vector<8x1x8xf32>
    %28 = vector.extract_strided_slice %22 {offsets = [0, 5, 2], sizes = [8, 1, 8], strides = [1, 1, 1]} : vector<8x8x15xf32> to vector<8x1x8xf32>
    %29 = vector.extract_strided_slice %22 {offsets = [0, 6, 1], sizes = [8, 1, 8], strides = [1, 1, 1]} : vector<8x8x15xf32> to vector<8x1x8xf32>
    %30 = vector.extract_strided_slice %22 {offsets = [0, 7, 0], sizes = [8, 1, 8], strides = [1, 1, 1]} : vector<8x8x15xf32> to vector<8x1x8xf32>
    %31 = tpu.concatenate %23, %24, %25, %26, %27, %28, %29, %30 in 1 : vector<8x1x8xf32>, vector<8x1x8xf32>, vector<8x1x8xf32>, vector<8x1x8xf32>, vector<8x1x8xf32>, vector<8x1x8xf32>, vector<8x1x8xf32>, vector<8x1x8xf32> -> vector<8x8x8xf32>
    %32 = arith.addf %20, %31 : vector<8x8x8xf32>
    %cst_19 = arith.constant dense<0xFF800000> : vector<8x8xf32>
    %33 = vector.multi_reduction <maximumf>, %32, %cst_19 [2] : vector<8x8x8xf32> to vector<8x8xf32>
    %34 = vector.shape_cast %33 : vector<8x8xf32> to vector<8x8x1xf32>
    %35 = vector.broadcast %34 : vector<8x8x1xf32> to vector<8x8x8xf32>
    %36 = arith.subf %32, %35 : vector<8x8x8xf32>
    %37 = math.exp %36 : vector<8x8x8xf32>
    %cst_20 = arith.constant dense<0.000000e+00> : vector<8x8xf32>
    %38 = vector.multi_reduction <add>, %37, %cst_20 [2] : vector<8x8x8xf32> to vector<8x8xf32>
    %39 = vector.shape_cast %38 : vector<8x8xf32> to vector<8x8x1xf32>
    %40 = vector.broadcast %39 : vector<8x8x1xf32> to vector<8x8x8xf32>
    %41 = arith.divf %37, %40 : vector<8x8x8xf32>
    %cst_21 = arith.constant dense<0.000000e+00> : vector<8x8x8xf32>
    %42 = tpu.matmul %41, %17, %cst_21 {dimension_numbers = #tpu.dot_dimension_numbers<[2], [1], [1], [2], [0, 0, 0, 1, 1, 2], [0], [0]>} : vector<8x8x8xf32>, vector<8x8x8xf32>, vector<8x8x8xf32> -> vector<8x8x8xf32>
    %43 = vector.shape_cast %42 : vector<8x8x8xf32> to vector<2x4x8x8xf32>
    %44 = tpu.transpose %43, [2, 0, 1, 3] : vector<2x4x8x8xf32> -> vector<8x2x4x8xf32>
    %45 = vector.shape_cast %44 : vector<8x2x4x8xf32> to vector<16x32xf32>
    %c0_22 = arith.constant 0 : index
    %c0_23 = arith.constant 0 : index
    %46 = vector.load %arg7[%c0_22, %c0_23] : memref<32x32xf32, #tpu.memory_space<vmem>>, vector<32x32xf32>
    %cst_24 = arith.constant dense<0.000000e+00> : vector<16x32xf32>
    %47 = tpu.matmul %45, %46, %cst_24 {dimension_numbers = #tpu.dot_dimension_numbers<[1], [0], [0], [1], [0, 0, 1, 1], [], []>} : vector<16x32xf32>, vector<32x32xf32>, vector<16x32xf32> -> vector<16x32xf32>
    %c0_25 = arith.constant 0 : index
    %c0_26 = arith.constant 0 : index
    %48 = vector.load %arg9[%c0_25, %c0_26] : memref<16x32xf32, #tpu.memory_space<vmem>>, vector<16x32xf32>
    tpu.vector_store %arg9[%c0_25, %c0_26], %47 {strides = array<i32>} : memref<16x32xf32, #tpu.memory_space<vmem>>, vector<16x32xf32>,
    return
  }
  func.func @transform_0(%arg0: i32) -> (i32, i32) {
    %c0_i32 = arith.constant 0 : i32
    %c0_i32_0 = arith.constant 0 : i32
    %c0_i32_1 = arith.constant 0 : i32
    return %c0_i32, %c0_i32_0 : i32, i32
  }
  func.func @transform_1(%arg0: i32) -> (i32, i32) {
    %c0_i32 = arith.constant 0 : i32
    %c0_i32_0 = arith.constant 0 : i32
    %c0_i32_1 = arith.constant 0 : i32
    return %c0_i32, %c0_i32_0 : i32, i32
  }
  func.func @transform_2(%arg0: i32) -> (i32, i32) {
    %c0_i32 = arith.constant 0 : i32
    %c0_i32_0 = arith.constant 0 : i32
    %c0_i32_1 = arith.constant 0 : i32
    return %c0_i32, %c0_i32_0 : i32, i32
  }
  func.func @transform_3(%arg0: i32) -> (i32, i32) {
    %c0_i32 = arith.constant 0 : i32
    %c0_i32_0 = arith.constant 0 : i32
    %c0_i32_1 = arith.constant 0 : i32
    return %c0_i32, %c0_i32_0 : i32, i32
  }
  func.func @transform_4(%arg0: i32) -> (i32, i32) {
    %c0_i32 = arith.constant 0 : i32
    %c0_i32_0 = arith.constant 0 : i32
    %c0_i32_1 = arith.constant 0 : i32
    return %c0_i32, %c0_i32_0 : i32, i32
  }
  func.func @transform_5(%arg0: i32) -> (i32, i32) {
    %c0_i32 = arith.constant 0 : i32
    %c0_i32_0 = arith.constant 0 : i32
    %c0_i32_1 = arith.constant 0 : i32
    return %c0_i32, %c0_i32_0 : i32, i32
  }
  func.func @transform_6(%arg0: i32) -> (i32, i32) {
    %c0_i32 = arith.constant 0 : i32
    %c0_i32_0 = arith.constant 0 : i32
    %c0_i32_1 = arith.constant 0 : i32
    return %c0_i32, %c0_i32_0 : i32, i32
  }
  func.func @transform_7(%arg0: i32) -> (i32, i32, i32) {
    %c0_i32 = arith.constant 0 : i32
    %c0_i32_0 = arith.constant 0 : i32
    %c0_i32_1 = arith.constant 0 : i32
    %c0_i32_2 = arith.constant 0 : i32
    return %c0_i32, %c0_i32_0, %c0_i32_1 : i32, i32, i32
  }
  func.func @transform_8(%arg0: i32) -> (i32, i32) {
    %c0_i32 = arith.constant 0 : i32
    %c0_i32_0 = arith.constant 0 : i32
    %c0_i32_1 = arith.constant 0 : i32
    return %c0_i32, %c0_i32_0 : i32, i32
  }
}

</mosaic_0001>

<llo_original>
// kernel: tpu_custom_call.1
$region0: #{tpu_custom_call.1}
  #allocation0 [shape = 'u32[]', space=smem, size = 0x4, offset = 0x4, fixed_abs, tag = 'smem constant byte address 0x4 - core index']
  #allocation1 [shape = 'u32[72,128]{1,0:T(1,128)}', space=vmem, size = 0x9000, scoped, tag = 'internal scratch']
  %s0 = inlined_call_operand.hbm [shape: f32[16,32], index: 0, kind: input, shape index: {}]
  %s1 = inlined_call_operand.hbm [shape: f32[16,32], index: 1, kind: input, shape index: {}]
  %s2 = inlined_call_operand.hbm [shape: f32[16,32], index: 2, kind: input, shape index: {}]
  %s3 = inlined_call_operand.hbm [shape: f32[32,32], index: 3, kind: input, shape index: {}]
  %s4 = inlined_call_operand.hbm [shape: f32[32,32], index: 4, kind: input, shape index: {}]
  %s5 = inlined_call_operand.hbm [shape: f32[32,32], index: 5, kind: input, shape index: {}]
  %s6 = inlined_call_operand.hbm [shape: f32[32,32], index: 6, kind: input, shape index: {}]
  %s7 = inlined_call_operand.hbm [shape: f32[8,8,15], index: 7, kind: input, shape index: {}]
  %s8 = inlined_call_operand.hbm [shape: f32[16,32], index: 8, kind: output, shape index: {}]
  %s9 = sld [smem:[#allocation0]]
  $region74: #{tpu_custom_call.1} parent=0
    _
  %s11 = ssub.s32 1, %s9
  %s12 = scalar_select 0, %s11, %s9
  $region1: #{tpu_custom_call.1} parent=0
    #allocation2 [shape = 'u8[8192]{0}', space=vmem, size = 0x2000, scoped, tag = 'input window, operand 0, single buffered']
    #allocation3 [shape = 's32[1]{0}', space=sflag, size = 0x4, scoped, tag = 'scoped memory for tpu_custom_call.1']
    #allocation4 [shape = 's32[1]{0}', space=sflag, size = 0x4, scoped, tag = 'scoped memory for tpu_custom_call.1']
    #allocation5 [shape = 'u8[8192]{0}', space=vmem, size = 0x2000, scoped, tag = 'input window, operand 1, single buffered']
    #allocation6 [shape = 's32[1]{0}', space=sflag, size = 0x4, scoped, tag = 'scoped memory for tpu_custom_call.1']
    #allocation7 [shape = 'u8[8192]{0}', space=vmem, size = 0x2000, scoped, tag = 'input window, operand 2, single buffered']
    #allocation8 [shape = 'u8[16384]{0}', space=vmem, size = 0x4000, scoped, tag = 'input window, operand 3, single buffered']
    #allocation9 [shape = 's32[1]{0}', space=sflag, size = 0x4, scoped, tag = 'scoped memory for tpu_custom_call.1']
    #allocation10 [shape = 'u8[16384]{0}', space=vmem, size = 0x4000, scoped, tag = 'input window, operand 4, single buffered']
    #allocation11 [shape = 'u8[16384]{0}', space=vmem, size = 0x4000, scoped, tag = 'input window, operand 5, single buffered']
    #allocation12 [shape = 's32[1]{0}', space=sflag, size = 0x4, scoped, tag = 'scoped memory for tpu_custom_call.1']
    #allocation13 [shape = 'u8[16384]{0}', space=vmem, size = 0x4000, scoped, tag = 'input window, operand 6, single buffered']
    #allocation14 [shape = 'u8[32768]{0}', space=vmem, size = 0x8000, scoped, tag = 'input window, operand 7, single buffered']
    #allocation15 [shape = 's32[1]{0}', space=sflag, size = 0x4, scoped, tag = 'scoped memory for tpu_custom_call.1']
    #allocation16 [shape = 'u8[8192]{0}', space=vmem, size = 0x2000, scoped, tag = 'output window, operand 0, single buffered']
    %13 = vsyncpa [#allocation3], 0
    %14 = vsyncpa [#allocation6], 0
    %15 = vsyncpa [#allocation9], 0
    %16 = vsyncpa [#allocation12], 0
    %17 = vsyncpa [#allocation15], 0
    %18 = vsyncpa [#allocation4], 0
    // Predicated region
    $region2: #{tpu_custom_call.1} parent=1 // pred_check
      _
    $region3: #{tpu_custom_call.1} parent=1 // pred_check_branch
      %20 = sbr.rel (0) target = $region5
    $region4: #{tpu_custom_call.1} parent=1 // pred_region
      %22 = vsyncadd [#allocation3], 0
      %s23 = sshll.u32 %s0, 4
      %s24 = int_to_ptr.hbm [resolvable:$true] %s23
      %s25 = sshll.u32 [#allocation2], 4
      %s26 = int_to_ptr.vmem [resolvable:$true] %s25
      %31 = dma.hbm_to_vmem [thread:$0]  %s24, 256, %s26, [#allocation3], 128, 128, 8
    $region5: #{tpu_custom_call.1} parent=1 // pred_fallthru
      _
    // Predicated region
    $region6: #{tpu_custom_call.1} parent=1 // pred_check
      _
    $region7: #{tpu_custom_call.1} parent=1 // pred_check_branch
      %33 = sbr.rel (0) target = $region9
    $region8: #{tpu_custom_call.1} parent=1 // pred_region
      %35 = vsyncadd [#allocation6], 0
      %s36 = sshll.u32 %s1, 4
      %s37 = int_to_ptr.hbm [resolvable:$true] %s36
      %s38 = sshll.u32 [#allocation5], 4
      %s39 = int_to_ptr.vmem [resolvable:$true] %s38
      %44 = dma.hbm_to_vmem [thread:$0]  %s37, 256, %s39, [#allocation6], 128, 128, 8
    $region9: #{tpu_custom_call.1} parent=1 // pred_fallthru
      _
    // Predicated region
    $region10: #{tpu_custom_call.1} parent=1 // pred_check
      _
    $region11: #{tpu_custom_call.1} parent=1 // pred_check_branch
      %46 = sbr.rel (0) target = $region13
    $region12: #{tpu_custom_call.1} parent=1 // pred_region
      %48 = vsyncadd [#allocation6], 0
      %s49 = sshll.u32 %s2, 4
      %s50 = int_to_ptr.hbm [resolvable:$true] %s49
      %s51 = sshll.u32 [#allocation7], 4
      %s52 = int_to_ptr.vmem [resolvable:$true] %s51
      %57 = dma.hbm_to_vmem [thread:$0]  %s50, 256, %s52, [#allocation6], 128, 128, 8
    $region13: #{tpu_custom_call.1} parent=1 // pred_fallthru
      _
    // Predicated region
    $region14: #{tpu_custom_call.1} parent=1 // pred_check
      _
    $region15: #{tpu_custom_call.1} parent=1 // pred_check_branch
      %59 = sbr.rel (0) target = $region17
    $region16: #{tpu_custom_call.1} parent=1 // pred_region
      %61 = vsyncadd [#allocation9], 0
      %s62 = sshll.u32 %s3, 4
      %s63 = int_to_ptr.hbm [resolvable:$true] %s62
      %s64 = sshll.u32 [#allocation8], 4
      %s65 = int_to_ptr.vmem [resolvable:$true] %s64
      %70 = dma.hbm_to_vmem [thread:$0]  %s63, 512, %s65, [#allocation9], 128, 128, 8
    $region17: #{tpu_custom_call.1} parent=1 // pred_fallthru
      _
    // Predicated region
    $region18: #{tpu_custom_call.1} parent=1 // pred_check
      _
    $region19: #{tpu_custom_call.1} parent=1 // pred_check_branch
      %72 = sbr.rel (0) target = $region21
    $region20: #{tpu_custom_call.1} parent=1 // pred_region
      %74 = vsyncadd [#allocation9], 0
      %s75 = sshll.u32 %s4, 4
      %s76 = int_to_ptr.hbm [resolvable:$true] %s75
      %s77 = sshll.u32 [#allocation10], 4
      %s78 = int_to_ptr.vmem [resolvable:$true] %s77
      %83 = dma.hbm_to_vmem [thread:$0]  %s76, 512, %s78, [#allocation9], 128, 128, 8
    $region21: #{tpu_custom_call.1} parent=1 // pred_fallthru
      _
    // Predicated region
    $region22: #{tpu_custom_call.1} parent=1 // pred_check
      _
    $region23: #{tpu_custom_call.1} parent=1 // pred_check_branch
      %85 = sbr.rel (0) target = $region25
    $region24: #{tpu_custom_call.1} parent=1 // pred_region
      %87 = vsyncadd [#allocation12], 0
      %s88 = sshll.u32 %s5, 4
      %s89 = int_to_ptr.hbm [resolvable:$true] %s88
      %s90 = sshll.u32 [#allocation11], 4
      %s91 = int_to_ptr.vmem [resolvable:$true] %s90
      %96 = dma.hbm_to_vmem [thread:$0]  %s89, 512, %s91, [#allocation12], 128, 128, 8
    $region25: #{tpu_custom_call.1} parent=1 // pred_fallthru
      _
    // Predicated region
    $region26: #{tpu_custom_call.1} parent=1 // pred_check
      _
    $region27: #{tpu_custom_call.1} parent=1 // pred_check_branch
      %98 = sbr.rel (0) target = $region29
    $region28: #{tpu_custom_call.1} parent=1 // pred_region
      %100 = vsyncadd [#allocation12], 0
      %s101 = sshll.u32 %s6, 4
      %s102 = int_to_ptr.hbm [resolvable:$true] %s101
      %s103 = sshll.u32 [#allocation13], 4
      %s104 = int_to_ptr.vmem [resolvable:$true] %s103
      %109 = dma.hbm_to_vmem [thread:$0]  %s102, 512, %s104, [#allocation12], 128, 128, 8
    $region29: #{tpu_custom_call.1} parent=1 // pred_fallthru
      _
    // Predicated region
    $region30: #{tpu_custom_call.1} parent=1 // pred_check
      _
    $region31: #{tpu_custom_call.1} parent=1 // pred_check_branch
      %111 = sbr.rel (0) target = $region33
    $region32: #{tpu_custom_call.1} parent=1 // pred_region
      %113 = vsyncadd [#allocation15], 0
      %s114 = sshll.u32 %s7, 4
      %s115 = int_to_ptr.hbm [resolvable:$true] %s114
      %s116 = sshll.u32 [#allocation14], 4
      %s117 = int_to_ptr.vmem [resolvable:$true] %s116
      %122 = dma.hbm_to_vmem [thread:$0]  %s115, 1024, %s117, [#allocation15], 128, 128, 8
    $region33: #{tpu_custom_call.1} parent=1 // pred_fallthru
      _
    // Predicated region
    $region34: #{tpu_custom_call.1} parent=1 // pred_check
      _
    $region35: #{tpu_custom_call.1} parent=1 // pred_check_branch
      %124 = sbr.rel (0) target = $region37
    $region36: #{tpu_custom_call.1} parent=1 // pred_region
      %126 = dma.done [#allocation3], 256
    $region37: #{tpu_custom_call.1} parent=1 // pred_fallthru
      _
    // Predicated region
    $region38: #{tpu_custom_call.1} parent=1 // pred_check
      _
    $region39: #{tpu_custom_call.1} parent=1 // pred_check_branch
      %128 = sbr.rel (0) target = $region41
    $region40: #{tpu_custom_call.1} parent=1 // pred_region
      %130 = dma.done [#allocation6], 256
    $region41: #{tpu_custom_call.1} parent=1 // pred_fallthru
      _
    // Predicated region
    $region42: #{tpu_custom_call.1} parent=1 // pred_check
      _
    $region43: #{tpu_custom_call.1} parent=1 // pred_check_branch
      %132 = sbr.rel (0) target = $region45
    $region44: #{tpu_custom_call.1} parent=1 // pred_region
      %134 = dma.done [#allocation6], 256
    $region45: #{tpu_custom_call.1} parent=1 // pred_fallthru
      _
    // Predicated region
    $region46: #{tpu_custom_call.1} parent=1 // pred_check
      _
    $region47: #{tpu_custom_call.1} parent=1 // pred_check_branch
      %136 = sbr.rel (0) target = $region49
    $region48: #{tpu_custom_call.1} parent=1 // pred_region
      %138 = dma.done [#allocation9], 512
    $region49: #{tpu_custom_call.1} parent=1 // pred_fallthru
      _
    // Predicated region
    $region50: #{tpu_custom_call.1} parent=1 // pred_check
      _
    $region51: #{tpu_custom_call.1} parent=1 // pred_check_branch
      %140 = sbr.rel (0) target = $region53
    $region52: #{tpu_custom_call.1} parent=1 // pred_region
      %142 = dma.done [#allocation9], 512
    $region53: #{tpu_custom_call.1} parent=1 // pred_fallthru
      _
    // Predicated region
    $region54: #{tpu_custom_call.1} parent=1 // pred_check
      _
    $region55: #{tpu_custom_call.1} parent=1 // pred_check_branch
      %144 = sbr.rel (0) target = $region57
    $region56: #{tpu_custom_call.1} parent=1 // pred_region
      %146 = dma.done [#allocation12], 512
    $region57: #{tpu_custom_call.1} parent=1 // pred_fallthru
      _
    // Predicated region
    $region58: #{tpu_custom_call.1} parent=1 // pred_check
      _
    $region59: #{tpu_custom_call.1} parent=1 // pred_check_branch
      %148 = sbr.rel (0) target = $region61
    $region60: #{tpu_custom_call.1} parent=1 // pred_region
      %150 = dma.done [#allocation12], 512
    $region61: #{tpu_custom_call.1} parent=1 // pred_fallthru
      _
    // Predicated region
    $region62: #{tpu_custom_call.1} parent=1 // pred_check
      _
    $region63: #{tpu_custom_call.1} parent=1 // pred_check_branch
      %152 = sbr.rel (0) target = $region65
    $region64: #{tpu_custom_call.1} parent=1 // pred_region
      %154 = dma.done [#allocation15], 1024
    $region65: #{tpu_custom_call.1} parent=1 // pred_fallthru
      _
    %v155 = vld [vmem:[#allocation2] sm:$0xff]
    %v156 = vld [vmem:[#allocation2 + $0x8] sm:$0xff]
    %v157 = vld [vmem:[#allocation8] sm:$0xff]
    %v158 = vld [vmem:[#allocation8 + $0x8] sm:$0xff]
    %v159 = vld [vmem:[#allocation8 + $0x10] sm:$0xff]
    %v160 = vld [vmem:[#allocation8 + $0x18] sm:$0xff]
    %vm161 = vcmask 261120
    %v163 = vsel %vm161, %v155, 0
    %v166 = vsel %vm161, %v156, 0
    %168 = vmatpush.msra.mxu0 0.0
    %169 = vmatpush.msra.mxu0 0.0
    %170 = vmatpush.msra.mxu0 0.0
    %171 = vmatpush.msra.mxu0 0.0
    %172 = vmatpush.msra.mxu0 0.0
    %173 = vmatpush.msra.mxu0 0.0
    %174 = vmatpush.msra.mxu0 0.0
    %175 = vmatpush.msra.mxu0 0.0
    %176 = vmatpush.msra.mxu0 0.0
    %177 = vmatpush.msra.mxu0 0.0
    %178 = vmatpush.msra.mxu0 0.0
    %179 = vmatpush.msra.mxu0 0.0
    %180 = vmatpush.msra.mxu0 %v160
    %181 = vmatpush.msra.mxu0 %v159
    %182 = vmatpush.msra.mxu0 %v158
    %183 = vmatpush.msra.mxu0 %v157
    %184 = vmatmul.f32.gmra.mxu0 %v163
    %v185 = vpop.f32.mrf.mxu0
    %v186 = vadd.f32 0.0, %v185
    %187 = vmatmul.f32.gmra.mxu0 %v166
    %v188 = vpop.f32.mrf.mxu0
    %v189 = vadd.f32 0.0, %v188
    %190 = vdwg.mxu0
    %v191 = vld [vmem:[#allocation5] sm:$0xff]
    %v192 = vld [vmem:[#allocation5 + $0x8] sm:$0xff]
    %v193 = vld [vmem:[#allocation10] sm:$0xff]
    %v194 = vld [vmem:[#allocation10 + $0x8] sm:$0xff]
    %v195 = vld [vmem:[#allocation10 + $0x10] sm:$0xff]
    %v196 = vld [vmem:[#allocation10 + $0x18] sm:$0xff]
    %v198 = vsel %vm161, %v191, 0
    %v201 = vsel %vm161, %v192, 0
    %203 = vmatpush.msra.mxu0 0.0
    %204 = vmatpush.msra.mxu0 0.0
    %205 = vmatpush.msra.mxu0 0.0
    %206 = vmatpush.msra.mxu0 0.0
    %207 = vmatpush.msra.mxu0 0.0
    %208 = vmatpush.msra.mxu0 0.0
    %209 = vmatpush.msra.mxu0 0.0
    %210 = vmatpush.msra.mxu0 0.0
    %211 = vmatpush.msra.mxu0 0.0
    %212 = vmatpush.msra.mxu0 0.0
    %213 = vmatpush.msra.mxu0 0.0
    %214 = vmatpush.msra.mxu0 0.0
    %215 = vmatpush.msra.mxu0 %v196
    %216 = vmatpush.msra.mxu0 %v195
    %217 = vmatpush.msra.mxu0 %v194
    %218 = vmatpush.msra.mxu0 %v193
    %219 = vmatmul.f32.gmra.mxu0 %v198
    %v220 = vpop.f32.mrf.mxu0
    %v221 = vadd.f32 0.0, %v220
    %222 = vmatmul.f32.gmra.mxu0 %v201
    %v223 = vpop.f32.mrf.mxu0
    %v224 = vadd.f32 0.0, %v223
    %225 = vdwg.mxu0
    %v226 = vld [vmem:[#allocation7] sm:$0xff]
    %v227 = vld [vmem:[#allocation7 + $0x8] sm:$0xff]
    %v228 = vld [vmem:[#allocation11] sm:$0xff]
    %v229 = vld [vmem:[#allocation11 + $0x8] sm:$0xff]
    %v230 = vld [vmem:[#allocation11 + $0x10] sm:$0xff]
    %v231 = vld [vmem:[#allocation11 + $0x18] sm:$0xff]
    %v233 = vsel %vm161, %v226, 0
    %v236 = vsel %vm161, %v227, 0
    %238 = vmatpush.msra.mxu0 0.0
    %239 = vmatpush.msra.mxu0 0.0
    %240 = vmatpush.msra.mxu0 0.0
    %241 = vmatpush.msra.mxu0 0.0
    %242 = vmatpush.msra.mxu0 0.0
    %243 = vmatpush.msra.mxu0 0.0
    %244 = vmatpush.msra.mxu0 0.0
    %245 = vmatpush.msra.mxu0 0.0
    %246 = vmatpush.msra.mxu0 0.0
    %247 = vmatpush.msra.mxu0 0.0
    %248 = vmatpush.msra.mxu0 0.0
    %249 = vmatpush.msra.mxu0 0.0
    %250 = vmatpush.msra.mxu0 %v231
    %251 = vmatpush.msra.mxu0 %v230
    %252 = vmatpush.msra.mxu0 %v229
    %253 = vmatpush.msra.mxu0 %v228
    %254 = vmatmul.f32.gmra.mxu0 %v233
    %v255 = vpop.f32.mrf.mxu0
    %v256 = vadd.f32 0.0, %v255
    %257 = vmatmul.f32.gmra.mxu0 %v236
    %v258 = vpop.f32.mrf.mxu0
    %v259 = vadd.f32 0.0, %v258
    %260 = vdwg.mxu0
    %263 = vrot.lane.b32.xlu0 %v186, 120
    %v264 = vpop.permute.xlu0 %263
    %265 = vrot.lane.b32.xlu0 %v189, 120
    %v266 = vpop.permute.xlu0 %265
    %269 = vrot.lane.b32.xlu0 %v186, 112
    %v270 = vpop.permute.xlu0 %269
    %271 = vrot.lane.b32.xlu0 %v189, 112
    %v272 = vpop.permute.xlu0 %271
    %275 = vrot.lane.b32.xlu0 %v186, 104
    %v276 = vpop.permute.xlu0 %275
    %277 = vrot.lane.b32.xlu0 %v189, 104
    %v278 = vpop.permute.xlu0 %277
    %v281 = vrot.slane %v270, 4
    %vm282 = vcmask 1047556
    %v283 = vsel %vm282, %v281, %v186
    %v284 = vrot.slane %v186, 4
    %v285 = vsel %vm282, %v270, %v284
    %v287 = vunpack.c.l.s4 1983009808
    %v288 = vunpack.c.0.s8 %v287
    %v289 = vperm.slane %v283, %v288
    %v291 = vunpack.c.l.s4 1983009808
    %v292 = vunpack.c.0.s8 %v291
    %v293 = vperm.slane %v285, %v292
    %v294 = vrot.slane %v276, 4
    %v295 = vsel %vm282, %v294, %v264
    %v296 = vrot.slane %v264, 4
    %v297 = vsel %vm282, %v276, %v296
    %v299 = vunpack.c.l.s4 1983009808
    %v300 = vunpack.c.0.s8 %v299
    %v301 = vperm.slane %v295, %v300
    %v303 = vunpack.c.l.s4 1983009808
    %v304 = vunpack.c.0.s8 %v303
    %v305 = vperm.slane %v297, %v304
    %v306 = vrot.slane %v301, 4
    %v307 = vsel %vm282, %v306, %v289
    %v308 = vrot.slane %v289, 4
    %v309 = vsel %vm282, %v301, %v308
    %v311 = vunpack.c.l.s4 1934713408
    %v312 = vunpack.c.0.s8 %v311
    %v313 = vperm.slane %v307, %v312
    %v315 = vunpack.c.l.s4 1934713408
    %v316 = vunpack.c.0.s8 %v315
    %v317 = vperm.slane %v309, %v316
    %v318 = vrot.slane %v305, 4
    %v319 = vsel %vm282, %v318, %v293
    %v320 = vrot.slane %v293, 4
    %v321 = vsel %vm282, %v305, %v320
    %v323 = vunpack.c.l.s4 1934713408
    %v324 = vunpack.c.0.s8 %v323
    %v325 = vperm.slane %v319, %v324
    %v327 = vunpack.c.l.s4 1934713408
    %v328 = vunpack.c.0.s8 %v327
    %v329 = vperm.slane %v321, %v328
    %v330 = vrot.slane %v313, 4
    %v331 = vsel %vm282, 0.0, %v330
    %v332 = vrot.slane %v317, 4
    %v333 = vsel %vm282, 0.0, %v332
    %v334 = vrot.slane %v325, 4
    %v335 = vsel %vm282, 0.0, %v334
    %v336 = vrot.slane %v329, 4
    %v337 = vsel %vm282, 0.0, %v336
    %v338 = vrot.slane %v272, 4
    %v339 = vsel %vm282, %v338, %v189
    %v340 = vrot.slane %v189, 4
    %v341 = vsel %vm282, %v272, %v340
    %v343 = vunpack.c.l.s4 1983009808
    %v344 = vunpack.c.0.s8 %v343
    %v345 = vperm.slane %v339, %v344
    %v347 = vunpack.c.l.s4 1983009808
    %v348 = vunpack.c.0.s8 %v347
    %v349 = vperm.slane %v341, %v348
    %v350 = vrot.slane %v278, 4
    %v351 = vsel %vm282, %v350, %v266
    %v352 = vrot.slane %v266, 4
    %v353 = vsel %vm282, %v278, %v352
    %v355 = vunpack.c.l.s4 1983009808
    %v356 = vunpack.c.0.s8 %v355
    %v357 = vperm.slane %v351, %v356
    %v359 = vunpack.c.l.s4 1983009808
    %v360 = vunpack.c.0.s8 %v359
    %v361 = vperm.slane %v353, %v360
    %v362 = vrot.slane %v357, 4
    %v363 = vsel %vm282, %v362, %v345
    %v364 = vrot.slane %v345, 4
    %v365 = vsel %vm282, %v357, %v364
    %v367 = vunpack.c.l.s4 1934713408
    %v368 = vunpack.c.0.s8 %v367
    %v369 = vperm.slane %v363, %v368
    %v371 = vunpack.c.l.s4 1934713408
    %v372 = vunpack.c.0.s8 %v371
    %v373 = vperm.slane %v365, %v372
    %v374 = vrot.slane %v361, 4
    %v375 = vsel %vm282, %v374, %v349
    %v376 = vrot.slane %v349, 4
    %v377 = vsel %vm282, %v361, %v376
    %v379 = vunpack.c.l.s4 1934713408
    %v380 = vunpack.c.0.s8 %v379
    %v381 = vperm.slane %v375, %v380
    %v383 = vunpack.c.l.s4 1934713408
    %v384 = vunpack.c.0.s8 %v383
    %v385 = vperm.slane %v377, %v384
    %v386 = vrot.slane %v369, 4
    %v387 = vsel %vm282, 0.0, %v386
    %v388 = vrot.slane %v373, 4
    %v389 = vsel %vm282, 0.0, %v388
    %v390 = vrot.slane %v381, 4
    %v391 = vsel %vm282, 0.0, %v390
    %v392 = vrot.slane %v385, 4
    %v393 = vsel %vm282, 0.0, %v392
    %v394 = vsel %vm282, %v334, %v313
    %v396 = vunpack.c.l.s4 1983009808
    %v397 = vunpack.c.0.s8 %v396
    %v398 = vperm.slane %v394, %v397
    %v399 = vsel %vm282, %v336, %v317
    %v401 = vunpack.c.l.s4 1983009808
    %v402 = vunpack.c.0.s8 %v401
    %v403 = vperm.slane %v399, %v402
    %v404 = vsel %vm282, %v390, %v369
    %v406 = vunpack.c.l.s4 1983009808
    %v407 = vunpack.c.0.s8 %v406
    %v408 = vperm.slane %v404, %v407
    %v409 = vsel %vm282, %v392, %v373
    %v411 = vunpack.c.l.s4 1983009808
    %v412 = vunpack.c.0.s8 %v411
    %v413 = vperm.slane %v409, %v412
    %v414 = vrot.slane %v403, 4
    %v415 = vsel %vm282, %v414, %v398
    %v416 = vrot.slane %v398, 4
    %v417 = vsel %vm282, %v403, %v416
    %v419 = vunpack.c.l.s4 1934713408
    %v420 = vunpack.c.0.s8 %v419
    %v421 = vperm.slane %v415, %v420
    %v423 = vunpack.c.l.s4 1934713408
    %v424 = vunpack.c.0.s8 %v423
    %v425 = vperm.slane %v417, %v424
    %v426 = vrot.slane %v413, 4
    %v427 = vsel %vm282, %v426, %v408
    %v428 = vrot.slane %v408, 4
    %v429 = vsel %vm282, %v413, %v428
    %v431 = vunpack.c.l.s4 1934713408
    %v432 = vunpack.c.0.s8 %v431
    %v433 = vperm.slane %v427, %v432
    %v435 = vunpack.c.l.s4 1934713408
    %v436 = vunpack.c.0.s8 %v435
    %v437 = vperm.slane %v429, %v436
    %v438 = vrot.slane %v433, 4
    %v439 = vsel %vm282, %v438, %v421
    %v440 = vrot.slane %v421, 4
    %v441 = vsel %vm282, %v433, %v440
    %v442 = vrot.slane %v437, 4
    %v443 = vsel %vm282, %v442, %v425
    %v444 = vrot.slane %v425, 4
    %v445 = vsel %vm282, %v437, %v444
    %v446 = vrot.slane %v335, 4
    %v447 = vsel %vm282, %v446, %v331
    %v449 = vunpack.c.l.s4 1983009808
    %v450 = vunpack.c.0.s8 %v449
    %v451 = vperm.slane %v447, %v450
    %v452 = vrot.slane %v337, 4
    %v453 = vsel %vm282, %v452, %v333
    %v455 = vunpack.c.l.s4 1983009808
    %v456 = vunpack.c.0.s8 %v455
    %v457 = vperm.slane %v453, %v456
    %v458 = vrot.slane %v391, 4
    %v459 = vsel %vm282, %v458, %v387
    %v461 = vunpack.c.l.s4 1983009808
    %v462 = vunpack.c.0.s8 %v461
    %v463 = vperm.slane %v459, %v462
    %v464 = vrot.slane %v393, 4
    %v465 = vsel %vm282, %v464, %v389
    %v467 = vunpack.c.l.s4 1983009808
    %v468 = vunpack.c.0.s8 %v467
    %v469 = vperm.slane %v465, %v468
    %v470 = vrot.slane %v457, 4
    %v471 = vsel %vm282, %v470, %v451
    %v472 = vrot.slane %v451, 4
    %v473 = vsel %vm282, %v457, %v472
    %v475 = vunpack.c.l.s4 1934713408
    %v476 = vunpack.c.0.s8 %v475
    %v477 = vperm.slane %v471, %v476
    %v479 = vunpack.c.l.s4 1934713408
    %v480 = vunpack.c.0.s8 %v479
    %v481 = vperm.slane %v473, %v480
    %v482 = vrot.slane %v469, 4
    %v483 = vsel %vm282, %v482, %v463
    %v484 = vrot.slane %v463, 4
    %v485 = vsel %vm282, %v469, %v484
    %v487 = vunpack.c.l.s4 1934713408
    %v488 = vunpack.c.0.s8 %v487
    %v489 = vperm.slane %v483, %v488
    %v491 = vunpack.c.l.s4 1934713408
    %v492 = vunpack.c.0.s8 %v491
    %v493 = vperm.slane %v485, %v492
    %v494 = vrot.slane %v489, 4
    %v495 = vsel %vm282, %v494, %v477
    %v496 = vrot.slane %v477, 4
    %v497 = vsel %vm282, %v489, %v496
    %v498 = vrot.slane %v493, 4
    %v499 = vsel %vm282, %v498, %v481
    %v500 = vrot.slane %v481, 4
    %v501 = vsel %vm282, %v493, %v500
    %504 = vrot.lane.b32.xlu0 %v221, 120
    %v505 = vpop.permute.xlu0 %504
    %506 = vrot.lane.b32.xlu0 %v224, 120
    %v507 = vpop.permute.xlu0 %506
    %510 = vrot.lane.b32.xlu0 %v221, 112
    %v511 = vpop.permute.xlu0 %510
    %512 = vrot.lane.b32.xlu0 %v224, 112
    %v513 = vpop.permute.xlu0 %512
    %516 = vrot.lane.b32.xlu0 %v221, 104
    %v517 = vpop.permute.xlu0 %516
    %518 = vrot.lane.b32.xlu0 %v224, 104
    %v519 = vpop.permute.xlu0 %518
    %v522 = vrot.slane %v511, 4
    %v523 = vsel %vm282, %v522, %v221
    %v524 = vrot.slane %v221, 4
    %v525 = vsel %vm282, %v511, %v524
    %v527 = vunpack.c.l.s4 1983009808
    %v528 = vunpack.c.0.s8 %v527
    %v529 = vperm.slane %v523, %v528
    %v531 = vunpack.c.l.s4 1983009808
    %v532 = vunpack.c.0.s8 %v531
    %v533 = vperm.slane %v525, %v532
    %v534 = vrot.slane %v517, 4
    %v535 = vsel %vm282, %v534, %v505
    %v536 = vrot.slane %v505, 4
    %v537 = vsel %vm282, %v517, %v536
    %v539 = vunpack.c.l.s4 1983009808
    %v540 = vunpack.c.0.s8 %v539
    %v541 = vperm.slane %v535, %v540
    %v543 = vunpack.c.l.s4 1983009808
    %v544 = vunpack.c.0.s8 %v543
    %v545 = vperm.slane %v537, %v544
    %v546 = vrot.slane %v541, 4
    %v547 = vsel %vm282, %v546, %v529
    %v548 = vrot.slane %v529, 4
    %v549 = vsel %vm282, %v541, %v548
    %v551 = vunpack.c.l.s4 1934713408
    %v552 = vunpack.c.0.s8 %v551
    %v553 = vperm.slane %v547, %v552
    %v555 = vunpack.c.l.s4 1934713408
    %v556 = vunpack.c.0.s8 %v555
    %v557 = vperm.slane %v549, %v556
    %v558 = vrot.slane %v545, 4
    %v559 = vsel %vm282, %v558, %v533
    %v560 = vrot.slane %v533, 4
    %v561 = vsel %vm282, %v545, %v560
    %v563 = vunpack.c.l.s4 1934713408
    %v564 = vunpack.c.0.s8 %v563
    %v565 = vperm.slane %v559, %v564
    %v567 = vunpack.c.l.s4 1934713408
    %v568 = vunpack.c.0.s8 %v567
    %v569 = vperm.slane %v561, %v568
    %v570 = vrot.slane %v553, 4
    %v571 = vsel %vm282, 0.0, %v570
    %v572 = vrot.slane %v557, 4
    %v573 = vsel %vm282, 0.0, %v572
    %v574 = vrot.slane %v565, 4
    %v575 = vsel %vm282, 0.0, %v574
    %v576 = vrot.slane %v569, 4
    %v577 = vsel %vm282, 0.0, %v576
    %v578 = vrot.slane %v513, 4
    %v579 = vsel %vm282, %v578, %v224
    %v580 = vrot.slane %v224, 4
    %v581 = vsel %vm282, %v513, %v580
    %v583 = vunpack.c.l.s4 1983009808
    %v584 = vunpack.c.0.s8 %v583
    %v585 = vperm.slane %v579, %v584
    %v587 = vunpack.c.l.s4 1983009808
    %v588 = vunpack.c.0.s8 %v587
    %v589 = vperm.slane %v581, %v588
    %v590 = vrot.slane %v519, 4
    %v591 = vsel %vm282, %v590, %v507
    %v592 = vrot.slane %v507, 4
    %v593 = vsel %vm282, %v519, %v592
    %v595 = vunpack.c.l.s4 1983009808
    %v596 = vunpack.c.0.s8 %v595
    %v597 = vperm.slane %v591, %v596
    %v599 = vunpack.c.l.s4 1983009808
    %v600 = vunpack.c.0.s8 %v599
    %v601 = vperm.slane %v593, %v600
    %v602 = vrot.slane %v597, 4
    %v603 = vsel %vm282, %v602, %v585
    %v604 = vrot.slane %v585, 4
    %v605 = vsel %vm282, %v597, %v604
    %v607 = vunpack.c.l.s4 1934713408
    %v608 = vunpack.c.0.s8 %v607
    %v609 = vperm.slane %v603, %v608
    %v611 = vunpack.c.l.s4 1934713408
    %v612 = vunpack.c.0.s8 %v611
    %v613 = vperm.slane %v605, %v612
    %v614 = vrot.slane %v601, 4
    %v615 = vsel %vm282, %v614, %v589
    %v616 = vrot.slane %v589, 4
    %v617 = vsel %vm282, %v601, %v616
    %v619 = vunpack.c.l.s4 1934713408
    %v620 = vunpack.c.0.s8 %v619
    %v621 = vperm.slane %v615, %v620
    %v623 = vunpack.c.l.s4 1934713408
    %v624 = vunpack.c.0.s8 %v623
    %v625 = vperm.slane %v617, %v624
    %v626 = vrot.slane %v609, 4
    %v627 = vsel %vm282, 0.0, %v626
    %v628 = vrot.slane %v613, 4
    %v629 = vsel %vm282, 0.0, %v628
    %v630 = vrot.slane %v621, 4
    %v631 = vsel %vm282, 0.0, %v630
    %v632 = vrot.slane %v625, 4
    %v633 = vsel %vm282, 0.0, %v632
    %v634 = vsel %vm282, %v574, %v553
    %v636 = vunpack.c.l.s4 1983009808
    %v637 = vunpack.c.0.s8 %v636
    %v638 = vperm.slane %v634, %v637
    %v639 = vsel %vm282, %v576, %v557
    %v641 = vunpack.c.l.s4 1983009808
    %v642 = vunpack.c.0.s8 %v641
    %v643 = vperm.slane %v639, %v642
    %v644 = vsel %vm282, %v630, %v609
    %v646 = vunpack.c.l.s4 1983009808
    %v647 = vunpack.c.0.s8 %v646
    %v648 = vperm.slane %v644, %v647
    %v649 = vsel %vm282, %v632, %v613
    %v651 = vunpack.c.l.s4 1983009808
    %v652 = vunpack.c.0.s8 %v651
    %v653 = vperm.slane %v649, %v652
    %v654 = vrot.slane %v643, 4
    %v655 = vsel %vm282, %v654, %v638
    %v656 = vrot.slane %v638, 4
    %v657 = vsel %vm282, %v643, %v656
    %v659 = vunpack.c.l.s4 1934713408
    %v660 = vunpack.c.0.s8 %v659
    %v661 = vperm.slane %v655, %v660
    %v663 = vunpack.c.l.s4 1934713408
    %v664 = vunpack.c.0.s8 %v663
    %v665 = vperm.slane %v657, %v664
    %v666 = vrot.slane %v653, 4
    %v667 = vsel %vm282, %v666, %v648
    %v668 = vrot.slane %v648, 4
    %v669 = vsel %vm282, %v653, %v668
    %v671 = vunpack.c.l.s4 1934713408
    %v672 = vunpack.c.0.s8 %v671
    %v673 = vperm.slane %v667, %v672
    %v675 = vunpack.c.l.s4 1934713408
    %v676 = vunpack.c.0.s8 %v675
    %v677 = vperm.slane %v669, %v676
    %v678 = vrot.slane %v673, 4
    %v679 = vsel %vm282, %v678, %v661
    %v680 = vrot.slane %v661, 4
    %v681 = vsel %vm282, %v673, %v680
    %v682 = vrot.slane %v677, 4
    %v683 = vsel %vm282, %v682, %v665
    %v684 = vrot.slane %v665, 4
    %v685 = vsel %vm282, %v677, %v684
    %v686 = vrot.slane %v575, 4
    %v687 = vsel %vm282, %v686, %v571
    %v689 = vunpack.c.l.s4 1983009808
    %v690 = vunpack.c.0.s8 %v689
    %v691 = vperm.slane %v687, %v690
    %v692 = vrot.slane %v577, 4
    %v693 = vsel %vm282, %v692, %v573
    %v695 = vunpack.c.l.s4 1983009808
    %v696 = vunpack.c.0.s8 %v695
    %v697 = vperm.slane %v693, %v696
    %v698 = vrot.slane %v631, 4
    %v699 = vsel %vm282, %v698, %v627
    %v701 = vunpack.c.l.s4 1983009808
    %v702 = vunpack.c.0.s8 %v701
    %v703 = vperm.slane %v699, %v702
    %v704 = vrot.slane %v633, 4
    %v705 = vsel %vm282, %v704, %v629
    %v707 = vunpack.c.l.s4 1983009808
    %v708 = vunpack.c.0.s8 %v707
    %v709 = vperm.slane %v705, %v708
    %v710 = vrot.slane %v697, 4
    %v711 = vsel %vm282, %v710, %v691
    %v712 = vrot.slane %v691, 4
    %v713 = vsel %vm282, %v697, %v712
    %v715 = vunpack.c.l.s4 1934713408
    %v716 = vunpack.c.0.s8 %v715
    %v717 = vperm.slane %v711, %v716
    %v719 = vunpack.c.l.s4 1934713408
    %v720 = vunpack.c.0.s8 %v719
    %v721 = vperm.slane %v713, %v720
    %v722 = vrot.slane %v709, 4
    %v723 = vsel %vm282, %v722, %v703
    %v724 = vrot.slane %v703, 4
    %v725 = vsel %vm282, %v709, %v724
    %v727 = vunpack.c.l.s4 1934713408
    %v728 = vunpack.c.0.s8 %v727
    %v729 = vperm.slane %v723, %v728
    %v731 = vunpack.c.l.s4 1934713408
    %v732 = vunpack.c.0.s8 %v731
    %v733 = vperm.slane %v725, %v732
    %v734 = vrot.slane %v729, 4
    %v735 = vsel %vm282, %v734, %v717
    %v736 = vrot.slane %v717, 4
    %v737 = vsel %vm282, %v729, %v736
    %v738 = vrot.slane %v733, 4
    %v739 = vsel %vm282, %v738, %v721
    %v740 = vrot.slane %v721, 4
    %v741 = vsel %vm282, %v733, %v740
    %744 = vrot.lane.b32.xlu0 %v256, 120
    %v745 = vpop.permute.xlu0 %744
    %746 = vrot.lane.b32.xlu0 %v259, 120
    %v747 = vpop.permute.xlu0 %746
    %750 = vrot.lane.b32.xlu0 %v256, 112
    %v751 = vpop.permute.xlu0 %750
    %752 = vrot.lane.b32.xlu0 %v259, 112
    %v753 = vpop.permute.xlu0 %752
    %756 = vrot.lane.b32.xlu0 %v256, 104
    %v757 = vpop.permute.xlu0 %756
    %758 = vrot.lane.b32.xlu0 %v259, 104
    %v759 = vpop.permute.xlu0 %758
    %v762 = vrot.slane %v751, 4
    %v763 = vsel %vm282, %v762, %v256
    %v764 = vrot.slane %v256, 4
    %v765 = vsel %vm282, %v751, %v764
    %v767 = vunpack.c.l.s4 1983009808
    %v768 = vunpack.c.0.s8 %v767
    %v769 = vperm.slane %v763, %v768
    %v771 = vunpack.c.l.s4 1983009808
    %v772 = vunpack.c.0.s8 %v771
    %v773 = vperm.slane %v765, %v772
    %v774 = vrot.slane %v757, 4
    %v775 = vsel %vm282, %v774, %v745
    %v776 = vrot.slane %v745, 4
    %v777 = vsel %vm282, %v757, %v776
    %v779 = vunpack.c.l.s4 1983009808
    %v780 = vunpack.c.0.s8 %v779
    %v781 = vperm.slane %v775, %v780
    %v783 = vunpack.c.l.s4 1983009808
    %v784 = vunpack.c.0.s8 %v783
    %v785 = vperm.slane %v777, %v784
    %v786 = vrot.slane %v781, 4
    %v787 = vsel %vm282, %v786, %v769
    %v788 = vrot.slane %v769, 4
    %v789 = vsel %vm282, %v781, %v788
    %v791 = vunpack.c.l.s4 1934713408
    %v792 = vunpack.c.0.s8 %v791
    %v793 = vperm.slane %v787, %v792
    %v795 = vunpack.c.l.s4 1934713408
    %v796 = vunpack.c.0.s8 %v795
    %v797 = vperm.slane %v789, %v796
    %v798 = vrot.slane %v785, 4
    %v799 = vsel %vm282, %v798, %v773
    %v800 = vrot.slane %v773, 4
    %v801 = vsel %vm282, %v785, %v800
    %v803 = vunpack.c.l.s4 1934713408
    %v804 = vunpack.c.0.s8 %v803
    %v805 = vperm.slane %v799, %v804
    %v807 = vunpack.c.l.s4 1934713408
    %v808 = vunpack.c.0.s8 %v807
    %v809 = vperm.slane %v801, %v808
    %v810 = vrot.slane %v793, 4
    %v811 = vsel %vm282, 0.0, %v810
    %v812 = vrot.slane %v797, 4
    %v813 = vsel %vm282, 0.0, %v812
    %v814 = vrot.slane %v805, 4
    %v815 = vsel %vm282, 0.0, %v814
    %v816 = vrot.slane %v809, 4
    %v817 = vsel %vm282, 0.0, %v816
    %v818 = vrot.slane %v753, 4
    %v819 = vsel %vm282, %v818, %v259
    %v820 = vrot.slane %v259, 4
    %v821 = vsel %vm282, %v753, %v820
    %v823 = vunpack.c.l.s4 1983009808
    %v824 = vunpack.c.0.s8 %v823
    %v825 = vperm.slane %v819, %v824
    %v827 = vunpack.c.l.s4 1983009808
    %v828 = vunpack.c.0.s8 %v827
    %v829 = vperm.slane %v821, %v828
    %v830 = vrot.slane %v759, 4
    %v831 = vsel %vm282, %v830, %v747
    %v832 = vrot.slane %v747, 4
    %v833 = vsel %vm282, %v759, %v832
    %v835 = vunpack.c.l.s4 1983009808
    %v836 = vunpack.c.0.s8 %v835
    %v837 = vperm.slane %v831, %v836
    %v839 = vunpack.c.l.s4 1983009808
    %v840 = vunpack.c.0.s8 %v839
    %v841 = vperm.slane %v833, %v840
    %v842 = vrot.slane %v837, 4
    %v843 = vsel %vm282, %v842, %v825
    %v844 = vrot.slane %v825, 4
    %v845 = vsel %vm282, %v837, %v844
    %v847 = vunpack.c.l.s4 1934713408
    %v848 = vunpack.c.0.s8 %v847
    %v849 = vperm.slane %v843, %v848
    %v851 = vunpack.c.l.s4 1934713408
    %v852 = vunpack.c.0.s8 %v851
    %v853 = vperm.slane %v845, %v852
    %v854 = vrot.slane %v841, 4
    %v855 = vsel %vm282, %v854, %v829
    %v856 = vrot.slane %v829, 4
    %v857 = vsel %vm282, %v841, %v856
    %v859 = vunpack.c.l.s4 1934713408
    %v860 = vunpack.c.0.s8 %v859
    %v861 = vperm.slane %v855, %v860
    %v863 = vunpack.c.l.s4 1934713408
    %v864 = vunpack.c.0.s8 %v863
    %v865 = vperm.slane %v857, %v864
    %v866 = vrot.slane %v849, 4
    %v867 = vsel %vm282, 0.0, %v866
    %v868 = vrot.slane %v853, 4
    %v869 = vsel %vm282, 0.0, %v868
    %v870 = vrot.slane %v861, 4
    %v871 = vsel %vm282, 0.0, %v870
    %v872 = vrot.slane %v865, 4
    %v873 = vsel %vm282, 0.0, %v872
    %v874 = vsel %vm282, %v814, %v793
    %v876 = vunpack.c.l.s4 1983009808
    %v877 = vunpack.c.0.s8 %v876
    %v878 = vperm.slane %v874, %v877
    %v879 = vsel %vm282, %v816, %v797
    %v881 = vunpack.c.l.s4 1983009808
    %v882 = vunpack.c.0.s8 %v881
    %v883 = vperm.slane %v879, %v882
    %v884 = vsel %vm282, %v870, %v849
    %v886 = vunpack.c.l.s4 1983009808
    %v887 = vunpack.c.0.s8 %v886
    %v888 = vperm.slane %v884, %v887
    %v889 = vsel %vm282, %v872, %v853
    %v891 = vunpack.c.l.s4 1983009808
    %v892 = vunpack.c.0.s8 %v891
    %v893 = vperm.slane %v889, %v892
    %v894 = vrot.slane %v883, 4
    %v895 = vsel %vm282, %v894, %v878
    %v896 = vrot.slane %v878, 4
    %v897 = vsel %vm282, %v883, %v896
    %v899 = vunpack.c.l.s4 1934713408
    %v900 = vunpack.c.0.s8 %v899
    %v901 = vperm.slane %v895, %v900
    %v903 = vunpack.c.l.s4 1934713408
    %v904 = vunpack.c.0.s8 %v903
    %v905 = vperm.slane %v897, %v904
    %v906 = vrot.slane %v893, 4
    %v907 = vsel %vm282, %v906, %v888
    %v908 = vrot.slane %v888, 4
    %v909 = vsel %vm282, %v893, %v908
    %v911 = vunpack.c.l.s4 1934713408
    %v912 = vunpack.c.0.s8 %v911
    %v913 = vperm.slane %v907, %v912
    %v915 = vunpack.c.l.s4 1934713408
    %v916 = vunpack.c.0.s8 %v915
    %v917 = vperm.slane %v909, %v916
    %v918 = vrot.slane %v913, 4
    %v919 = vsel %vm282, %v918, %v901
    %v920 = vrot.slane %v901, 4
    %v921 = vsel %vm282, %v913, %v920
    %v922 = vrot.slane %v917, 4
    %v923 = vsel %vm282, %v922, %v905
    %v924 = vrot.slane %v905, 4
    %v925 = vsel %vm282, %v917, %v924
    %v926 = vrot.slane %v815, 4
    %v927 = vsel %vm282, %v926, %v811
    %v929 = vunpack.c.l.s4 1983009808
    %v930 = vunpack.c.0.s8 %v929
    %v931 = vperm.slane %v927, %v930
    %v932 = vrot.slane %v817, 4
    %v933 = vsel %vm282, %v932, %v813
    %v935 = vunpack.c.l.s4 1983009808
    %v936 = vunpack.c.0.s8 %v935
    %v937 = vperm.slane %v933, %v936
    %v938 = vrot.slane %v871, 4
    %v939 = vsel %vm282, %v938, %v867
    %v941 = vunpack.c.l.s4 1983009808
    %v942 = vunpack.c.0.s8 %v941
    %v943 = vperm.slane %v939, %v942
    %v944 = vrot.slane %v873, 4
    %v945 = vsel %vm282, %v944, %v869
    %v947 = vunpack.c.l.s4 1983009808
    %v948 = vunpack.c.0.s8 %v947
    %v949 = vperm.slane %v945, %v948
    %v950 = vrot.slane %v937, 4
    %v951 = vsel %vm282, %v950, %v931
    %v952 = vrot.slane %v931, 4
    %v953 = vsel %vm282, %v937, %v952
    %v955 = vunpack.c.l.s4 1934713408
    %v956 = vunpack.c.0.s8 %v955
    %v957 = vperm.slane %v951, %v956
    %v959 = vunpack.c.l.s4 1934713408
    %v960 = vunpack.c.0.s8 %v959
    %v961 = vperm.slane %v953, %v960
    %v962 = vrot.slane %v949, 4
    %v963 = vsel %vm282, %v962, %v943
    %v964 = vrot.slane %v943, 4
    %v965 = vsel %vm282, %v949, %v964
    %v967 = vunpack.c.l.s4 1934713408
    %v968 = vunpack.c.0.s8 %v967
    %v969 = vperm.slane %v963, %v968
    %v971 = vunpack.c.l.s4 1934713408
    %v972 = vunpack.c.0.s8 %v971
    %v973 = vperm.slane %v965, %v972
    %v974 = vrot.slane %v969, 4
    %v975 = vsel %vm282, %v974, %v957
    %v976 = vrot.slane %v957, 4
    %v977 = vsel %vm282, %v969, %v976
    %v978 = vrot.slane %v973, 4
    %v979 = vsel %vm282, %v978, %v961
    %v980 = vrot.slane %v961, 4
    %v981 = vsel %vm282, %v973, %v980
    %vm982 = vcmask 64512
    %v984 = vsel %vm982, %v439, 0
    %v987 = vsel %vm982, %v679, 0
    %989 = vmatpush.xpose.msra.mxu0 0.0
    %990 = vmatpush.xpose.msra.mxu0 0.0
    %991 = vmatpush.xpose.msra.mxu0 0.0
    %992 = vmatpush.xpose.msra.mxu0 0.0
    %993 = vmatpush.xpose.msra.mxu0 0.0
    %994 = vmatpush.xpose.msra.mxu0 0.0
    %995 = vmatpush.xpose.msra.mxu0 0.0
    %996 = vmatpush.xpose.msra.mxu0 0.0
    %997 = vmatpush.xpose.msra.mxu0 0.0
    %998 = vmatpush.xpose.msra.mxu0 0.0
    %999 = vmatpush.xpose.msra.mxu0 0.0
    %1000 = vmatpush.xpose.msra.mxu0 0.0
    %1001 = vmatpush.xpose.msra.mxu0 0.0
    %1002 = vmatpush.xpose.msra.mxu0 0.0
    %1003 = vmatpush.xpose.msra.mxu0 0.0
    %1004 = vmatpush.xpose.msra.mxu0 %v987
    %1005 = vmatmul.f32.gmra.mxu0 %v984
    %v1006 = vpop.f32.mrf.mxu0
    %v1007 = vadd.f32 0.0, %v1006
    %1008 = vdwg.mxu0
    %v1010 = vsel %vm982, %v441, 0
    %v1013 = vsel %vm982, %v681, 0
    %1015 = vmatpush.xpose.msra.mxu0 0.0
    %1016 = vmatpush.xpose.msra.mxu0 0.0
    %1017 = vmatpush.xpose.msra.mxu0 0.0
    %1018 = vmatpush.xpose.msra.mxu0 0.0
    %1019 = vmatpush.xpose.msra.mxu0 0.0
    %1020 = vmatpush.xpose.msra.mxu0 0.0
    %1021 = vmatpush.xpose.msra.mxu0 0.0
    %1022 = vmatpush.xpose.msra.mxu0 0.0
    %1023 = vmatpush.xpose.msra.mxu0 0.0
    %1024 = vmatpush.xpose.msra.mxu0 0.0
    %1025 = vmatpush.xpose.msra.mxu0 0.0
    %1026 = vmatpush.xpose.msra.mxu0 0.0
    %1027 = vmatpush.xpose.msra.mxu0 0.0
    %1028 = vmatpush.xpose.msra.mxu0 0.0
    %1029 = vmatpush.xpose.msra.mxu0 0.0
    %1030 = vmatpush.xpose.msra.mxu0 %v1013
    %1031 = vmatmul.f32.gmra.mxu0 %v1010
    %v1032 = vpop.f32.mrf.mxu0
    %v1033 = vadd.f32 0.0, %v1032
    %1034 = vdwg.mxu0
    %v1036 = vsel %vm982, %v443, 0
    %v1039 = vsel %vm982, %v683, 0
    %1041 = vmatpush.xpose.msra.mxu0 0.0
    %1042 = vmatpush.xpose.msra.mxu0 0.0
    %1043 = vmatpush.xpose.msra.mxu0 0.0
    %1044 = vmatpush.xpose.msra.mxu0 0.0
    %1045 = vmatpush.xpose.msra.mxu0 0.0
    %1046 = vmatpush.xpose.msra.mxu0 0.0
    %1047 = vmatpush.xpose.msra.mxu0 0.0
    %1048 = vmatpush.xpose.msra.mxu0 0.0
    %1049 = vmatpush.xpose.msra.mxu0 0.0
    %1050 = vmatpush.xpose.msra.mxu0 0.0
    %1051 = vmatpush.xpose.msra.mxu0 0.0
    %1052 = vmatpush.xpose.msra.mxu0 0.0
    %1053 = vmatpush.xpose.msra.mxu0 0.0
    %1054 = vmatpush.xpose.msra.mxu0 0.0
    %1055 = vmatpush.xpose.msra.mxu0 0.0
    %1056 = vmatpush.xpose.msra.mxu0 %v1039
    %1057 = vmatmul.f32.gmra.mxu0 %v1036
    %v1058 = vpop.f32.mrf.mxu0
    %v1059 = vadd.f32 0.0, %v1058
    %1060 = vdwg.mxu0
    %v1062 = vsel %vm982, %v445, 0
    %v1065 = vsel %vm982, %v685, 0
    %1067 = vmatpush.xpose.msra.mxu0 0.0
    %1068 = vmatpush.xpose.msra.mxu0 0.0
    %1069 = vmatpush.xpose.msra.mxu0 0.0
    %1070 = vmatpush.xpose.msra.mxu0 0.0
    %1071 = vmatpush.xpose.msra.mxu0 0.0
    %1072 = vmatpush.xpose.msra.mxu0 0.0
    %1073 = vmatpush.xpose.msra.mxu0 0.0
    %1074 = vmatpush.xpose.msra.mxu0 0.0
    %1075 = vmatpush.xpose.msra.mxu0 0.0
    %1076 = vmatpush.xpose.msra.mxu0 0.0
    %1077 = vmatpush.xpose.msra.mxu0 0.0
    %1078 = vmatpush.xpose.msra.mxu0 0.0
    %1079 = vmatpush.xpose.msra.mxu0 0.0
    %1080 = vmatpush.xpose.msra.mxu0 0.0
    %1081 = vmatpush.xpose.msra.mxu0 0.0
    %1082 = vmatpush.xpose.msra.mxu0 %v1065
    %1083 = vmatmul.f32.gmra.mxu0 %v1062
    %v1084 = vpop.f32.mrf.mxu0
    %v1085 = vadd.f32 0.0, %v1084
    %1086 = vdwg.mxu0
    %v1088 = vsel %vm982, %v495, 0
    %v1091 = vsel %vm982, %v735, 0
    %1093 = vmatpush.xpose.msra.mxu0 0.0
    %1094 = vmatpush.xpose.msra.mxu0 0.0
    %1095 = vmatpush.xpose.msra.mxu0 0.0
    %1096 = vmatpush.xpose.msra.mxu0 0.0
    %1097 = vmatpush.xpose.msra.mxu0 0.0
    %1098 = vmatpush.xpose.msra.mxu0 0.0
    %1099 = vmatpush.xpose.msra.mxu0 0.0
    %1100 = vmatpush.xpose.msra.mxu0 0.0
    %1101 = vmatpush.xpose.msra.mxu0 0.0
    %1102 = vmatpush.xpose.msra.mxu0 0.0
    %1103 = vmatpush.xpose.msra.mxu0 0.0
    %1104 = vmatpush.xpose.msra.mxu0 0.0
    %1105 = vmatpush.xpose.msra.mxu0 0.0
    %1106 = vmatpush.xpose.msra.mxu0 0.0
    %1107 = vmatpush.xpose.msra.mxu0 0.0
    %1108 = vmatpush.xpose.msra.mxu0 %v1091
    %1109 = vmatmul.f32.gmra.mxu0 %v1088
    %v1110 = vpop.f32.mrf.mxu0
    %v1111 = vadd.f32 0.0, %v1110
    %1112 = vdwg.mxu0
    %v1114 = vsel %vm982, %v497, 0
    %v1117 = vsel %vm982, %v737, 0
    %1119 = vmatpush.xpose.msra.mxu0 0.0
    %1120 = vmatpush.xpose.msra.mxu0 0.0
    %1121 = vmatpush.xpose.msra.mxu0 0.0
    %1122 = vmatpush.xpose.msra.mxu0 0.0
    %1123 = vmatpush.xpose.msra.mxu0 0.0
    %1124 = vmatpush.xpose.msra.mxu0 0.0
    %1125 = vmatpush.xpose.msra.mxu0 0.0
    %1126 = vmatpush.xpose.msra.mxu0 0.0
    %1127 = vmatpush.xpose.msra.mxu0 0.0
    %1128 = vmatpush.xpose.msra.mxu0 0.0
    %1129 = vmatpush.xpose.msra.mxu0 0.0
    %1130 = vmatpush.xpose.msra.mxu0 0.0
    %1131 = vmatpush.xpose.msra.mxu0 0.0
    %1132 = vmatpush.xpose.msra.mxu0 0.0
    %1133 = vmatpush.xpose.msra.mxu0 0.0
    %1134 = vmatpush.xpose.msra.mxu0 %v1117
    %1135 = vmatmul.f32.gmra.mxu0 %v1114
    %v1136 = vpop.f32.mrf.mxu0
    %v1137 = vadd.f32 0.0, %v1136
    %1138 = vdwg.mxu0
    %v1140 = vsel %vm982, %v499, 0
    %v1143 = vsel %vm982, %v739, 0
    %1145 = vmatpush.xpose.msra.mxu0 0.0
    %1146 = vmatpush.xpose.msra.mxu0 0.0
    %1147 = vmatpush.xpose.msra.mxu0 0.0
    %1148 = vmatpush.xpose.msra.mxu0 0.0
    %1149 = vmatpush.xpose.msra.mxu0 0.0
    %1150 = vmatpush.xpose.msra.mxu0 0.0
    %1151 = vmatpush.xpose.msra.mxu0 0.0
    %1152 = vmatpush.xpose.msra.mxu0 0.0
    %1153 = vmatpush.xpose.msra.mxu0 0.0
    %1154 = vmatpush.xpose.msra.mxu0 0.0
    %1155 = vmatpush.xpose.msra.mxu0 0.0
    %1156 = vmatpush.xpose.msra.mxu0 0.0
    %1157 = vmatpush.xpose.msra.mxu0 0.0
    %1158 = vmatpush.xpose.msra.mxu0 0.0
    %1159 = vmatpush.xpose.msra.mxu0 0.0
    %1160 = vmatpush.xpose.msra.mxu0 %v1143
    %1161 = vmatmul.f32.gmra.mxu0 %v1140
    %v1162 = vpop.f32.mrf.mxu0
    %v1163 = vadd.f32 0.0, %v1162
    %1164 = vdwg.mxu0
    %v1166 = vsel %vm982, %v501, 0
    %v1169 = vsel %vm982, %v741, 0
    %1171 = vmatpush.xpose.msra.mxu0 0.0
    %1172 = vmatpush.xpose.msra.mxu0 0.0
    %1173 = vmatpush.xpose.msra.mxu0 0.0
    %1174 = vmatpush.xpose.msra.mxu0 0.0
    %1175 = vmatpush.xpose.msra.mxu0 0.0
    %1176 = vmatpush.xpose.msra.mxu0 0.0
    %1177 = vmatpush.xpose.msra.mxu0 0.0
    %1178 = vmatpush.xpose.msra.mxu0 0.0
    %1179 = vmatpush.xpose.msra.mxu0 0.0
    %1180 = vmatpush.xpose.msra.mxu0 0.0
    %1181 = vmatpush.xpose.msra.mxu0 0.0
    %1182 = vmatpush.xpose.msra.mxu0 0.0
    %1183 = vmatpush.xpose.msra.mxu0 0.0
    %1184 = vmatpush.xpose.msra.mxu0 0.0
    %1185 = vmatpush.xpose.msra.mxu0 0.0
    %1186 = vmatpush.xpose.msra.mxu0 %v1169
    %1187 = vmatmul.f32.gmra.mxu0 %v1166
    %v1188 = vpop.f32.mrf.mxu0
    %v1189 = vadd.f32 0.0, %v1188
    %1190 = vdwg.mxu0
    %v1191 = vmul.f32 %v1007, 0.35355338
    %v1192 = vmul.f32 %v1033, 0.35355338
    %v1193 = vmul.f32 %v1059, 0.35355338
    %v1194 = vmul.f32 %v1085, 0.35355338
    %v1195 = vmul.f32 %v1111, 0.35355338
    %v1196 = vmul.f32 %v1137, 0.35355338
    %v1197 = vmul.f32 %v1163, 0.35355338
    %v1198 = vmul.f32 %v1189, 0.35355338
    %v1199 = vld [vmem:[#allocation14] sm:$0xff]
    %v1200 = vld [vmem:[#allocation14 + $0x8] sm:$0xff]
    %v1201 = vld [vmem:[#allocation14 + $0x10] sm:$0xff]
    %v1202 = vld [vmem:[#allocation14 + $0x18] sm:$0xff]
    %v1203 = vld [vmem:[#allocation14 + $0x20] sm:$0xff]
    %v1204 = vld [vmem:[#allocation14 + $0x28] sm:$0xff]
    %v1205 = vld [vmem:[#allocation14 + $0x30] sm:$0xff]
    %v1206 = vld [vmem:[#allocation14 + $0x38] sm:$0xff]
    %1207 = vmatpush.msra.mxu0 0.0
    %1208 = vmatpush.msra.mxu0 0.0
    %1209 = vmatpush.msra.mxu0 0.0
    %1210 = vmatpush.msra.mxu0 0.0
    %1211 = vmatpush.msra.mxu0 0.0
    %1212 = vmatpush.msra.mxu0 0.0
    %1213 = vmatpush.msra.mxu0 0.0
    %1214 = vmatpush.msra.mxu0 0.0
    %1215 = vmatpush.msra.mxu0 0.0
    %1216 = vmatpush.msra.mxu0 0.0
    %1217 = vmatpush.msra.mxu0 0.0
    %1218 = vmatpush.msra.mxu0 0.0
    %1219 = vmatpush.msra.mxu0 0.0
    %1220 = vmatpush.msra.mxu0 0.0
    %1221 = vmatpush.msra.mxu0 0.0
    %1222 = vmatpush.msra.mxu0 %v1199
    %1223 = vmatmul.f32.gmra.mxu0 %v984
    %v1224 = vpop.f32.mrf.mxu0
    %v1225 = vadd.f32 0.0, %v1224
    %1226 = vdwg.mxu0
    %1227 = vmatpush.msra.mxu0 0.0
    %1228 = vmatpush.msra.mxu0 0.0
    %1229 = vmatpush.msra.mxu0 0.0
    %1230 = vmatpush.msra.mxu0 0.0
    %1231 = vmatpush.msra.mxu0 0.0
    %1232 = vmatpush.msra.mxu0 0.0
    %1233 = vmatpush.msra.mxu0 0.0
    %1234 = vmatpush.msra.mxu0 0.0
    %1235 = vmatpush.msra.mxu0 0.0
    %1236 = vmatpush.msra.mxu0 0.0
    %1237 = vmatpush.msra.mxu0 0.0
    %1238 = vmatpush.msra.mxu0 0.0
    %1239 = vmatpush.msra.mxu0 0.0
    %1240 = vmatpush.msra.mxu0 0.0
    %1241 = vmatpush.msra.mxu0 0.0
    %1242 = vmatpush.msra.mxu0 %v1200
    %1243 = vmatmul.f32.gmra.mxu0 %v1010
    %v1244 = vpop.f32.mrf.mxu0
    %v1245 = vadd.f32 0.0, %v1244
    %1246 = vdwg.mxu0
    %1247 = vmatpush.msra.mxu0 0.0
    %1248 = vmatpush.msra.mxu0 0.0
    %1249 = vmatpush.msra.mxu0 0.0
    %1250 = vmatpush.msra.mxu0 0.0
    %1251 = vmatpush.msra.mxu0 0.0
    %1252 = vmatpush.msra.mxu0 0.0
    %1253 = vmatpush.msra.mxu0 0.0
    %1254 = vmatpush.msra.mxu0 0.0
    %1255 = vmatpush.msra.mxu0 0.0
    %1256 = vmatpush.msra.mxu0 0.0
    %1257 = vmatpush.msra.mxu0 0.0
    %1258 = vmatpush.msra.mxu0 0.0
    %1259 = vmatpush.msra.mxu0 0.0
    %1260 = vmatpush.msra.mxu0 0.0
    %1261 = vmatpush.msra.mxu0 0.0
    %1262 = vmatpush.msra.mxu0 %v1201
    %1263 = vmatmul.f32.gmra.mxu0 %v1036
    %v1264 = vpop.f32.mrf.mxu0
    %v1265 = vadd.f32 0.0, %v1264
    %1266 = vdwg.mxu0
    %1267 = vmatpush.msra.mxu0 0.0
    %1268 = vmatpush.msra.mxu0 0.0
    %1269 = vmatpush.msra.mxu0 0.0
    %1270 = vmatpush.msra.mxu0 0.0
    %1271 = vmatpush.msra.mxu0 0.0
    %1272 = vmatpush.msra.mxu0 0.0
    %1273 = vmatpush.msra.mxu0 0.0
    %1274 = vmatpush.msra.mxu0 0.0
    %1275 = vmatpush.msra.mxu0 0.0
    %1276 = vmatpush.msra.mxu0 0.0
    %1277 = vmatpush.msra.mxu0 0.0
    %1278 = vmatpush.msra.mxu0 0.0
    %1279 = vmatpush.msra.mxu0 0.0
    %1280 = vmatpush.msra.mxu0 0.0
    %1281 = vmatpush.msra.mxu0 0.0
    %1282 = vmatpush.msra.mxu0 %v1202
    %1283 = vmatmul.f32.gmra.mxu0 %v1062
    %v1284 = vpop.f32.mrf.mxu0
    %v1285 = vadd.f32 0.0, %v1284
    %1286 = vdwg.mxu0
    %1287 = vmatpush.msra.mxu0 0.0
    %1288 = vmatpush.msra.mxu0 0.0
    %1289 = vmatpush.msra.mxu0 0.0
    %1290 = vmatpush.msra.mxu0 0.0
    %1291 = vmatpush.msra.mxu0 0.0
    %1292 = vmatpush.msra.mxu0 0.0
    %1293 = vmatpush.msra.mxu0 0.0
    %1294 = vmatpush.msra.mxu0 0.0
    %1295 = vmatpush.msra.mxu0 0.0
    %1296 = vmatpush.msra.mxu0 0.0
    %1297 = vmatpush.msra.mxu0 0.0
    %1298 = vmatpush.msra.mxu0 0.0
    %1299 = vmatpush.msra.mxu0 0.0
    %1300 = vmatpush.msra.mxu0 0.0
    %1301 = vmatpush.msra.mxu0 0.0
    %1302 = vmatpush.msra.mxu0 %v1203
    %1303 = vmatmul.f32.gmra.mxu0 %v1088
    %v1304 = vpop.f32.mrf.mxu0
    %v1305 = vadd.f32 0.0, %v1304
    %1306 = vdwg.mxu0
    %1307 = vmatpush.msra.mxu0 0.0
    %1308 = vmatpush.msra.mxu0 0.0
    %1309 = vmatpush.msra.mxu0 0.0
    %1310 = vmatpush.msra.mxu0 0.0
    %1311 = vmatpush.msra.mxu0 0.0
    %1312 = vmatpush.msra.mxu0 0.0
    %1313 = vmatpush.msra.mxu0 0.0
    %1314 = vmatpush.msra.mxu0 0.0
    %1315 = vmatpush.msra.mxu0 0.0
    %1316 = vmatpush.msra.mxu0 0.0
    %1317 = vmatpush.msra.mxu0 0.0
    %1318 = vmatpush.msra.mxu0 0.0
    %1319 = vmatpush.msra.mxu0 0.0
    %1320 = vmatpush.msra.mxu0 0.0
    %1321 = vmatpush.msra.mxu0 0.0
    %1322 = vmatpush.msra.mxu0 %v1204
    %1323 = vmatmul.f32.gmra.mxu0 %v1114
    %v1324 = vpop.f32.mrf.mxu0
    %v1325 = vadd.f32 0.0, %v1324
    %1326 = vdwg.mxu0
    %1327 = vmatpush.msra.mxu0 0.0
    %1328 = vmatpush.msra.mxu0 0.0
    %1329 = vmatpush.msra.mxu0 0.0
    %1330 = vmatpush.msra.mxu0 0.0
    %1331 = vmatpush.msra.mxu0 0.0
    %1332 = vmatpush.msra.mxu0 0.0
    %1333 = vmatpush.msra.mxu0 0.0
    %1334 = vmatpush.msra.mxu0 0.0
    %1335 = vmatpush.msra.mxu0 0.0
    %1336 = vmatpush.msra.mxu0 0.0
    %1337 = vmatpush.msra.mxu0 0.0
    %1338 = vmatpush.msra.mxu0 0.0
    %1339 = vmatpush.msra.mxu0 0.0
    %1340 = vmatpush.msra.mxu0 0.0
    %1341 = vmatpush.msra.mxu0 0.0
    %1342 = vmatpush.msra.mxu0 %v1205
    %1343 = vmatmul.f32.gmra.mxu0 %v1140
    %v1344 = vpop.f32.mrf.mxu0
    %v1345 = vadd.f32 0.0, %v1344
    %1346 = vdwg.mxu0
    %1347 = vmatpush.msra.mxu0 0.0
    %1348 = vmatpush.msra.mxu0 0.0
    %1349 = vmatpush.msra.mxu0 0.0
    %1350 = vmatpush.msra.mxu0 0.0
    %1351 = vmatpush.msra.mxu0 0.0
    %1352 = vmatpush.msra.mxu0 0.0
    %1353 = vmatpush.msra.mxu0 0.0
    %1354 = vmatpush.msra.mxu0 0.0
    %1355 = vmatpush.msra.mxu0 0.0
    %1356 = vmatpush.msra.mxu0 0.0
    %1357 = vmatpush.msra.mxu0 0.0
    %1358 = vmatpush.msra.mxu0 0.0
    %1359 = vmatpush.msra.mxu0 0.0
    %1360 = vmatpush.msra.mxu0 0.0
    %1361 = vmatpush.msra.mxu0 0.0
    %1362 = vmatpush.msra.mxu0 %v1206
    %1363 = vmatmul.f32.gmra.mxu0 %v1166
    %v1364 = vpop.f32.mrf.mxu0
    %v1365 = vadd.f32 0.0, %v1364
    %1366 = vdwg.mxu0
    %1375 = vrot.lane.b32.xlu0 %v1225, 1
    %v1376 = vpop.permute.xlu0 %1375
    %1377 = vrot.lane.b32.xlu0 %v1245, 1
    %v1378 = vpop.permute.xlu0 %1377
    %1379 = vrot.lane.b32.xlu0 %v1265, 1
    %v1380 = vpop.permute.xlu0 %1379
    %1381 = vrot.lane.b32.xlu0 %v1285, 1
    %v1382 = vpop.permute.xlu0 %1381
    %1383 = vrot.lane.b32.xlu0 %v1305, 1
    %v1384 = vpop.permute.xlu0 %1383
    %1385 = vrot.lane.b32.xlu0 %v1325, 1
    %v1386 = vpop.permute.xlu0 %1385
    %1387 = vrot.lane.b32.xlu0 %v1345, 1
    %v1388 = vpop.permute.xlu0 %1387
    %1389 = vrot.lane.b32.xlu0 %v1365, 1
    %v1390 = vpop.permute.xlu0 %1389
    %1399 = vrot.lane.b32.xlu0 %v1225, 2
    %v1400 = vpop.permute.xlu0 %1399
    %1401 = vrot.lane.b32.xlu0 %v1245, 2
    %v1402 = vpop.permute.xlu0 %1401
    %1403 = vrot.lane.b32.xlu0 %v1265, 2
    %v1404 = vpop.permute.xlu0 %1403
    %1405 = vrot.lane.b32.xlu0 %v1285, 2
    %v1406 = vpop.permute.xlu0 %1405
    %1407 = vrot.lane.b32.xlu0 %v1305, 2
    %v1408 = vpop.permute.xlu0 %1407
    %1409 = vrot.lane.b32.xlu0 %v1325, 2
    %v1410 = vpop.permute.xlu0 %1409
    %1411 = vrot.lane.b32.xlu0 %v1345, 2
    %v1412 = vpop.permute.xlu0 %1411
    %1413 = vrot.lane.b32.xlu0 %v1365, 2
    %v1414 = vpop.permute.xlu0 %1413
    %1423 = vrot.lane.b32.xlu0 %v1225, 3
    %v1424 = vpop.permute.xlu0 %1423
    %1425 = vrot.lane.b32.xlu0 %v1245, 3
    %v1426 = vpop.permute.xlu0 %1425
    %1427 = vrot.lane.b32.xlu0 %v1265, 3
    %v1428 = vpop.permute.xlu0 %1427
    %1429 = vrot.lane.b32.xlu0 %v1285, 3
    %v1430 = vpop.permute.xlu0 %1429
    %1431 = vrot.lane.b32.xlu0 %v1305, 3
    %v1432 = vpop.permute.xlu0 %1431
    %1433 = vrot.lane.b32.xlu0 %v1325, 3
    %v1434 = vpop.permute.xlu0 %1433
    %1435 = vrot.lane.b32.xlu0 %v1345, 3
    %v1436 = vpop.permute.xlu0 %1435
    %1437 = vrot.lane.b32.xlu0 %v1365, 3
    %v1438 = vpop.permute.xlu0 %1437
    %1447 = vrot.lane.b32.xlu0 %v1225, 4
    %v1448 = vpop.permute.xlu0 %1447
    %1449 = vrot.lane.b32.xlu0 %v1245, 4
    %v1450 = vpop.permute.xlu0 %1449
    %1451 = vrot.lane.b32.xlu0 %v1265, 4
    %v1452 = vpop.permute.xlu0 %1451
    %1453 = vrot.lane.b32.xlu0 %v1285, 4
    %v1454 = vpop.permute.xlu0 %1453
    %1455 = vrot.lane.b32.xlu0 %v1305, 4
    %v1456 = vpop.permute.xlu0 %1455
    %1457 = vrot.lane.b32.xlu0 %v1325, 4
    %v1458 = vpop.permute.xlu0 %1457
    %1459 = vrot.lane.b32.xlu0 %v1345, 4
    %v1460 = vpop.permute.xlu0 %1459
    %1461 = vrot.lane.b32.xlu0 %v1365, 4
    %v1462 = vpop.permute.xlu0 %1461
    %1471 = vrot.lane.b32.xlu0 %v1225, 5
    %v1472 = vpop.permute.xlu0 %1471
    %1473 = vrot.lane.b32.xlu0 %v1245, 5
    %v1474 = vpop.permute.xlu0 %1473
    %1475 = vrot.lane.b32.xlu0 %v1265, 5
    %v1476 = vpop.permute.xlu0 %1475
    %1477 = vrot.lane.b32.xlu0 %v1285, 5
    %v1478 = vpop.permute.xlu0 %1477
    %1479 = vrot.lane.b32.xlu0 %v1305, 5
    %v1480 = vpop.permute.xlu0 %1479
    %1481 = vrot.lane.b32.xlu0 %v1325, 5
    %v1482 = vpop.permute.xlu0 %1481
    %1483 = vrot.lane.b32.xlu0 %v1345, 5
    %v1484 = vpop.permute.xlu0 %1483
    %1485 = vrot.lane.b32.xlu0 %v1365, 5
    %v1486 = vpop.permute.xlu0 %1485
    %1495 = vrot.lane.b32.xlu0 %v1225, 6
    %v1496 = vpop.permute.xlu0 %1495
    %1497 = vrot.lane.b32.xlu0 %v1245, 6
    %v1498 = vpop.permute.xlu0 %1497
    %1499 = vrot.lane.b32.xlu0 %v1265, 6
    %v1500 = vpop.permute.xlu0 %1499
    %1501 = vrot.lane.b32.xlu0 %v1285, 6
    %v1502 = vpop.permute.xlu0 %1501
    %1503 = vrot.lane.b32.xlu0 %v1305, 6
    %v1504 = vpop.permute.xlu0 %1503
    %1505 = vrot.lane.b32.xlu0 %v1325, 6
    %v1506 = vpop.permute.xlu0 %1505
    %1507 = vrot.lane.b32.xlu0 %v1345, 6
    %v1508 = vpop.permute.xlu0 %1507
    %1509 = vrot.lane.b32.xlu0 %v1365, 6
    %v1510 = vpop.permute.xlu0 %1509
    %1519 = vrot.lane.b32.xlu0 %v1225, 7
    %v1520 = vpop.permute.xlu0 %1519
    %1521 = vrot.lane.b32.xlu0 %v1245, 7
    %v1522 = vpop.permute.xlu0 %1521
    %1523 = vrot.lane.b32.xlu0 %v1265, 7
    %v1524 = vpop.permute.xlu0 %1523
    %1525 = vrot.lane.b32.xlu0 %v1285, 7
    %v1526 = vpop.permute.xlu0 %1525
    %1527 = vrot.lane.b32.xlu0 %v1305, 7
    %v1528 = vpop.permute.xlu0 %1527
    %1529 = vrot.lane.b32.xlu0 %v1325, 7
    %v1530 = vpop.permute.xlu0 %1529
    %1531 = vrot.lane.b32.xlu0 %v1345, 7
    %v1532 = vpop.permute.xlu0 %1531
    %1533 = vrot.lane.b32.xlu0 %v1365, 7
    %v1534 = vpop.permute.xlu0 %1533
    %vm1543 = vcmask 1040384
    %v1544 = vsel %vm1543, %v1225, %v1376
    %v1545 = vsel %vm1543, %v1245, %v1378
    %v1546 = vsel %vm1543, %v1265, %v1380
    %v1547 = vsel %vm1543, %v1285, %v1382
    %v1548 = vsel %vm1543, %v1305, %v1384
    %v1549 = vsel %vm1543, %v1325, %v1386
    %v1550 = vsel %vm1543, %v1345, %v1388
    %v1551 = vsel %vm1543, %v1365, %v1390
    %vm1552 = vcmask 1041408
    %v1553 = vsel %vm1552, %v1544, %v1400
    %v1554 = vsel %vm1552, %v1545, %v1402
    %v1555 = vsel %vm1552, %v1546, %v1404
    %v1556 = vsel %vm1552, %v1547, %v1406
    %v1557 = vsel %vm1552, %v1548, %v1408
    %v1558 = vsel %vm1552, %v1549, %v1410
    %v1559 = vsel %vm1552, %v1550, %v1412
    %v1560 = vsel %vm1552, %v1551, %v1414
    %vm1561 = vcmask 1042432
    %v1562 = vsel %vm1561, %v1553, %v1424
    %v1563 = vsel %vm1561, %v1554, %v1426
    %v1564 = vsel %vm1561, %v1555, %v1428
    %v1565 = vsel %vm1561, %v1556, %v1430
    %v1566 = vsel %vm1561, %v1557, %v1432
    %v1567 = vsel %vm1561, %v1558, %v1434
    %v1568 = vsel %vm1561, %v1559, %v1436
    %v1569 = vsel %vm1561, %v1560, %v1438
    %vm1570 = vcmask 1043456
    %v1571 = vsel %vm1570, %v1562, %v1448
    %v1572 = vsel %vm1570, %v1563, %v1450
    %v1573 = vsel %vm1570, %v1564, %v1452
    %v1574 = vsel %vm1570, %v1565, %v1454
    %v1575 = vsel %vm1570, %v1566, %v1456
    %v1576 = vsel %vm1570, %v1567, %v1458
    %v1577 = vsel %vm1570, %v1568, %v1460
    %v1578 = vsel %vm1570, %v1569, %v1462
    %vm1579 = vcmask 1044480
    %v1580 = vsel %vm1579, %v1571, %v1472
    %v1581 = vsel %vm1579, %v1572, %v1474
    %v1582 = vsel %vm1579, %v1573, %v1476
    %v1583 = vsel %vm1579, %v1574, %v1478
    %v1584 = vsel %vm1579, %v1575, %v1480
    %v1585 = vsel %vm1579, %v1576, %v1482
    %v1586 = vsel %vm1579, %v1577, %v1484
    %v1587 = vsel %vm1579, %v1578, %v1486
    %vm1588 = vcmask 1045504
    %v1589 = vsel %vm1588, %v1580, %v1496
    %v1590 = vsel %vm1588, %v1581, %v1498
    %v1591 = vsel %vm1588, %v1582, %v1500
    %v1592 = vsel %vm1588, %v1583, %v1502
    %v1593 = vsel %vm1588, %v1584, %v1504
    %v1594 = vsel %vm1588, %v1585, %v1506
    %v1595 = vsel %vm1588, %v1586, %v1508
    %v1596 = vsel %vm1588, %v1587, %v1510
    %vm1597 = vcmask 1046528
    %v1598 = vsel %vm1597, %v1589, %v1520
    %v1599 = vsel %vm1597, %v1590, %v1522
    %v1600 = vsel %vm1597, %v1591, %v1524
    %v1601 = vsel %vm1597, %v1592, %v1526
    %v1602 = vsel %vm1597, %v1593, %v1528
    %v1603 = vsel %vm1597, %v1594, %v1530
    %v1604 = vsel %vm1597, %v1595, %v1532
    %v1605 = vsel %vm1597, %v1596, %v1534
    %1614 = vrot.lane.b32.xlu0 %v1598, 121
    %v1615 = vpop.permute.xlu0 %1614
    %1616 = vrot.lane.b32.xlu0 %v1599, 121
    %v1617 = vpop.permute.xlu0 %1616
    %1618 = vrot.lane.b32.xlu0 %v1600, 121
    %v1619 = vpop.permute.xlu0 %1618
    %1620 = vrot.lane.b32.xlu0 %v1601, 121
    %v1621 = vpop.permute.xlu0 %1620
    %1622 = vrot.lane.b32.xlu0 %v1602, 121
    %v1623 = vpop.permute.xlu0 %1622
    %1624 = vrot.lane.b32.xlu0 %v1603, 121
    %v1625 = vpop.permute.xlu0 %1624
    %1626 = vrot.lane.b32.xlu0 %v1604, 121
    %v1627 = vpop.permute.xlu0 %1626
    %1628 = vrot.lane.b32.xlu0 %v1605, 121
    %v1629 = vpop.permute.xlu0 %1628
    %v1638 = vadd.f32 %v1191, %v1615
    %v1639 = vadd.f32 %v1192, %v1617
    %v1640 = vadd.f32 %v1193, %v1619
    %v1641 = vadd.f32 %v1194, %v1621
    %v1642 = vadd.f32 %v1195, %v1623
    %v1643 = vadd.f32 %v1196, %v1625
    %v1644 = vadd.f32 %v1197, %v1627
    %v1645 = vadd.f32 %v1198, %v1629
    %v1646 = vsel %vm982, %v1638, -inf
    %1647 = vmax.xlane.f32.xlu0 %v1646
    %v1648 = vpop.xlane.xlu0 %1647
    %v1649 = vsel %vm982, %v1639, -inf
    %1650 = vmax.xlane.f32.xlu0 %v1649
    %v1651 = vpop.xlane.xlu0 %1650
    %v1652 = vsel %vm982, %v1640, -inf
    %1653 = vmax.xlane.f32.xlu0 %v1652
    %v1654 = vpop.xlane.xlu0 %1653
    %v1655 = vsel %vm982, %v1641, -inf
    %1656 = vmax.xlane.f32.xlu0 %v1655
    %v1657 = vpop.xlane.xlu0 %1656
    %v1658 = vsel %vm982, %v1642, -inf
    %1659 = vmax.xlane.f32.xlu0 %v1658
    %v1660 = vpop.xlane.xlu0 %1659
    %v1661 = vsel %vm982, %v1643, -inf
    %1662 = vmax.xlane.f32.xlu0 %v1661
    %v1663 = vpop.xlane.xlu0 %1662
    %v1664 = vsel %vm982, %v1644, -inf
    %1665 = vmax.xlane.f32.xlu0 %v1664
    %v1666 = vpop.xlane.xlu0 %1665
    %v1667 = vsel %vm982, %v1645, -inf
    %1668 = vmax.xlane.f32.xlu0 %v1667
    %v1669 = vpop.xlane.xlu0 %1668
    %v1670 = vsub.f32 %v1638, %v1648
    %v1671 = vsub.f32 %v1639, %v1651
    %v1672 = vsub.f32 %v1640, %v1654
    %v1673 = vsub.f32 %v1641, %v1657
    %v1674 = vsub.f32 %v1642, %v1660
    %v1675 = vsub.f32 %v1643, %v1663
    %v1676 = vsub.f32 %v1644, %v1666
    %v1677 = vsub.f32 %v1645, %v1669
    %v1678 = vmul.f32 %v1670, 1.442695
    %v1679 = vpow.pop %v1678
    %v1680 = vmul.f32 %v1671, 1.442695
    %v1681 = vpow.pop %v1680
    %v1682 = vmul.f32 %v1672, 1.442695
    %v1683 = vpow.pop %v1682
    %v1684 = vmul.f32 %v1673, 1.442695
    %v1685 = vpow.pop %v1684
    %v1686 = vmul.f32 %v1674, 1.442695
    %v1687 = vpow.pop %v1686
    %v1688 = vmul.f32 %v1675, 1.442695
    %v1689 = vpow.pop %v1688
    %v1690 = vmul.f32 %v1676, 1.442695
    %v1691 = vpow.pop %v1690
    %v1692 = vmul.f32 %v1677, 1.442695
    %v1693 = vpow.pop %v1692
    %v1694 = vsel %vm982, %v1679, 0.0
    %1695 = vadd.xlane.f32.xlu0 %v1694
    %v1696 = vpop.xlane.xlu0 %1695
    %v1697 = vsel %vm982, %v1681, 0.0
    %1698 = vadd.xlane.f32.xlu0 %v1697
    %v1699 = vpop.xlane.xlu0 %1698
    %v1700 = vsel %vm982, %v1683, 0.0
    %1701 = vadd.xlane.f32.xlu0 %v1700
    %v1702 = vpop.xlane.xlu0 %1701
    %v1703 = vsel %vm982, %v1685, 0.0
    %1704 = vadd.xlane.f32.xlu0 %v1703
    %v1705 = vpop.xlane.xlu0 %1704
    %v1706 = vsel %vm982, %v1687, 0.0
    %1707 = vadd.xlane.f32.xlu0 %v1706
    %v1708 = vpop.xlane.xlu0 %1707
    %v1709 = vsel %vm982, %v1689, 0.0
    %1710 = vadd.xlane.f32.xlu0 %v1709
    %v1711 = vpop.xlane.xlu0 %1710
    %v1712 = vsel %vm982, %v1691, 0.0
    %1713 = vadd.xlane.f32.xlu0 %v1712
    %v1714 = vpop.xlane.xlu0 %1713
    %v1715 = vsel %vm982, %v1693, 0.0
    %1716 = vadd.xlane.f32.xlu0 %v1715
    %v1717 = vpop.xlane.xlu0 %1716
    %v1718 = vrcp.pop %v1696
    %v1719 = vmul.f32 %v1696, %v1718
    %v1720 = vsub.f32 1.0, %v1719
    %v1721 = vmul.f32 %v1718, %v1720
    %v1722 = vadd.f32 %v1718, %v1721
    %vm1723 = vweird.f32 %v1696
    %vm1724 = vweird.f32 %v1718
    %vm1725 = vmor %vm1723, %vm1724
    %v1726 = vsel %vm1725, %v1718, %v1722
    %v1727 = vand.u32 2147483647, %v1696
    %vm1728 = vcmp.eq.f32.partialorder %v1727, 8.507059e+37
    %v1729 = vand.u32 %v1696, 2147483648
    %v1730 = vor.u32 1.1754944e-38, %v1729
    %v1731 = vsel %vm1728, %v1730, %v1726
    %v1732 = vmul.f32 %v1679, %v1731
    %v1733 = vrcp.pop %v1699
    %v1734 = vmul.f32 %v1699, %v1733
    %v1735 = vsub.f32 1.0, %v1734
    %v1736 = vmul.f32 %v1733, %v1735
    %v1737 = vadd.f32 %v1733, %v1736
    %vm1738 = vweird.f32 %v1699
    %vm1739 = vweird.f32 %v1733
    %vm1740 = vmor %vm1738, %vm1739
    %v1741 = vsel %vm1740, %v1733, %v1737
    %v1742 = vand.u32 2147483647, %v1699
    %vm1743 = vcmp.eq.f32.partialorder %v1742, 8.507059e+37
    %v1744 = vand.u32 %v1699, 2147483648
    %v1745 = vor.u32 1.1754944e-38, %v1744
    %v1746 = vsel %vm1743, %v1745, %v1741
    %v1747 = vmul.f32 %v1681, %v1746
    %v1748 = vrcp.pop %v1702
    %v1749 = vmul.f32 %v1702, %v1748
    %v1750 = vsub.f32 1.0, %v1749
    %v1751 = vmul.f32 %v1748, %v1750
    %v1752 = vadd.f32 %v1748, %v1751
    %vm1753 = vweird.f32 %v1702
    %vm1754 = vweird.f32 %v1748
    %vm1755 = vmor %vm1753, %vm1754
    %v1756 = vsel %vm1755, %v1748, %v1752
    %v1757 = vand.u32 2147483647, %v1702
    %vm1758 = vcmp.eq.f32.partialorder %v1757, 8.507059e+37
    %v1759 = vand.u32 %v1702, 2147483648
    %v1760 = vor.u32 1.1754944e-38, %v1759
    %v1761 = vsel %vm1758, %v1760, %v1756
    %v1762 = vmul.f32 %v1683, %v1761
    %v1763 = vrcp.pop %v1705
    %v1764 = vmul.f32 %v1705, %v1763
    %v1765 = vsub.f32 1.0, %v1764
    %v1766 = vmul.f32 %v1763, %v1765
    %v1767 = vadd.f32 %v1763, %v1766
    %vm1768 = vweird.f32 %v1705
    %vm1769 = vweird.f32 %v1763
    %vm1770 = vmor %vm1768, %vm1769
    %v1771 = vsel %vm1770, %v1763, %v1767
    %v1772 = vand.u32 2147483647, %v1705
    %vm1773 = vcmp.eq.f32.partialorder %v1772, 8.507059e+37
    %v1774 = vand.u32 %v1705, 2147483648
    %v1775 = vor.u32 1.1754944e-38, %v1774
    %v1776 = vsel %vm1773, %v1775, %v1771
    %v1777 = vmul.f32 %v1685, %v1776
    %v1778 = vrcp.pop %v1708
    %v1779 = vmul.f32 %v1708, %v1778
    %v1780 = vsub.f32 1.0, %v1779
    %v1781 = vmul.f32 %v1778, %v1780
    %v1782 = vadd.f32 %v1778, %v1781
    %vm1783 = vweird.f32 %v1708
    %vm1784 = vweird.f32 %v1778
    %vm1785 = vmor %vm1783, %vm1784
    %v1786 = vsel %vm1785, %v1778, %v1782
    %v1787 = vand.u32 2147483647, %v1708
    %vm1788 = vcmp.eq.f32.partialorder %v1787, 8.507059e+37
    %v1789 = vand.u32 %v1708, 2147483648
    %v1790 = vor.u32 1.1754944e-38, %v1789
    %v1791 = vsel %vm1788, %v1790, %v1786
    %v1792 = vmul.f32 %v1687, %v1791
    %v1793 = vrcp.pop %v1711
    %v1794 = vmul.f32 %v1711, %v1793
    %v1795 = vsub.f32 1.0, %v1794
    %v1796 = vmul.f32 %v1793, %v1795
    %v1797 = vadd.f32 %v1793, %v1796
    %vm1798 = vweird.f32 %v1711
    %vm1799 = vweird.f32 %v1793
    %vm1800 = vmor %vm1798, %vm1799
    %v1801 = vsel %vm1800, %v1793, %v1797
    %v1802 = vand.u32 2147483647, %v1711
    %vm1803 = vcmp.eq.f32.partialorder %v1802, 8.507059e+37
    %v1804 = vand.u32 %v1711, 2147483648
    %v1805 = vor.u32 1.1754944e-38, %v1804
    %v1806 = vsel %vm1803, %v1805, %v1801
    %v1807 = vmul.f32 %v1689, %v1806
    %v1808 = vrcp.pop %v1714
    %v1809 = vmul.f32 %v1714, %v1808
    %v1810 = vsub.f32 1.0, %v1809
    %v1811 = vmul.f32 %v1808, %v1810
    %v1812 = vadd.f32 %v1808, %v1811
    %vm1813 = vweird.f32 %v1714
    %vm1814 = vweird.f32 %v1808
    %vm1815 = vmor %vm1813, %vm1814
    %v1816 = vsel %vm1815, %v1808, %v1812
    %v1817 = vand.u32 2147483647, %v1714
    %vm1818 = vcmp.eq.f32.partialorder %v1817, 8.507059e+37
    %v1819 = vand.u32 %v1714, 2147483648
    %v1820 = vor.u32 1.1754944e-38, %v1819
    %v1821 = vsel %vm1818, %v1820, %v1816
    %v1822 = vmul.f32 %v1691, %v1821
    %v1823 = vrcp.pop %v1717
    %v1824 = vmul.f32 %v1717, %v1823
    %v1825 = vsub.f32 1.0, %v1824
    %v1826 = vmul.f32 %v1823, %v1825
    %v1827 = vadd.f32 %v1823, %v1826
    %vm1828 = vweird.f32 %v1717
    %vm1829 = vweird.f32 %v1823
    %vm1830 = vmor %vm1828, %vm1829
    %v1831 = vsel %vm1830, %v1823, %v1827
    %v1832 = vand.u32 2147483647, %v1717
    %vm1833 = vcmp.eq.f32.partialorder %v1832, 8.507059e+37
    %v1834 = vand.u32 %v1717, 2147483648
    %v1835 = vor.u32 1.1754944e-38, %v1834
    %v1836 = vsel %vm1833, %v1835, %v1831
    %v1837 = vmul.f32 %v1693, %v1836
    %v1839 = vsel %vm982, %v1732, 0
    %1841 = vmatpush.msra.mxu0 0.0
    %1842 = vmatpush.msra.mxu0 0.0
    %1843 = vmatpush.msra.mxu0 0.0
    %1844 = vmatpush.msra.mxu0 0.0
    %1845 = vmatpush.msra.mxu0 0.0
    %1846 = vmatpush.msra.mxu0 0.0
    %1847 = vmatpush.msra.mxu0 0.0
    %1848 = vmatpush.msra.mxu0 0.0
    %1849 = vmatpush.msra.mxu0 0.0
    %1850 = vmatpush.msra.mxu0 0.0
    %1851 = vmatpush.msra.mxu0 0.0
    %1852 = vmatpush.msra.mxu0 0.0
    %1853 = vmatpush.msra.mxu0 0.0
    %1854 = vmatpush.msra.mxu0 0.0
    %1855 = vmatpush.msra.mxu0 0.0
    %1856 = vmatpush.msra.mxu0 %v919
    %1857 = vmatmul.f32.gmra.mxu0 %v1839
    %v1858 = vpop.f32.mrf.mxu0
    %v1859 = vadd.f32 0.0, %v1858
    %1860 = vdwg.mxu0
    %v1862 = vsel %vm982, %v1747, 0
    %1864 = vmatpush.msra.mxu0 0.0
    %1865 = vmatpush.msra.mxu0 0.0
    %1866 = vmatpush.msra.mxu0 0.0
    %1867 = vmatpush.msra.mxu0 0.0
    %1868 = vmatpush.msra.mxu0 0.0
    %1869 = vmatpush.msra.mxu0 0.0
    %1870 = vmatpush.msra.mxu0 0.0
    %1871 = vmatpush.msra.mxu0 0.0
    %1872 = vmatpush.msra.mxu0 0.0
    %1873 = vmatpush.msra.mxu0 0.0
    %1874 = vmatpush.msra.mxu0 0.0
    %1875 = vmatpush.msra.mxu0 0.0
    %1876 = vmatpush.msra.mxu0 0.0
    %1877 = vmatpush.msra.mxu0 0.0
    %1878 = vmatpush.msra.mxu0 0.0
    %1879 = vmatpush.msra.mxu0 %v921
    %1880 = vmatmul.f32.gmra.mxu0 %v1862
    %v1881 = vpop.f32.mrf.mxu0
    %v1882 = vadd.f32 0.0, %v1881
    %1883 = vdwg.mxu0
    %v1885 = vsel %vm982, %v1762, 0
    %1887 = vmatpush.msra.mxu0 0.0
    %1888 = vmatpush.msra.mxu0 0.0
    %1889 = vmatpush.msra.mxu0 0.0
    %1890 = vmatpush.msra.mxu0 0.0
    %1891 = vmatpush.msra.mxu0 0.0
    %1892 = vmatpush.msra.mxu0 0.0
    %1893 = vmatpush.msra.mxu0 0.0
    %1894 = vmatpush.msra.mxu0 0.0
    %1895 = vmatpush.msra.mxu0 0.0
    %1896 = vmatpush.msra.mxu0 0.0
    %1897 = vmatpush.msra.mxu0 0.0
    %1898 = vmatpush.msra.mxu0 0.0
    %1899 = vmatpush.msra.mxu0 0.0
    %1900 = vmatpush.msra.mxu0 0.0
    %1901 = vmatpush.msra.mxu0 0.0
    %1902 = vmatpush.msra.mxu0 %v923
    %1903 = vmatmul.f32.gmra.mxu0 %v1885
    %v1904 = vpop.f32.mrf.mxu0
    %v1905 = vadd.f32 0.0, %v1904
    %1906 = vdwg.mxu0
    %v1908 = vsel %vm982, %v1777, 0
    %1910 = vmatpush.msra.mxu0 0.0
    %1911 = vmatpush.msra.mxu0 0.0
    %1912 = vmatpush.msra.mxu0 0.0
    %1913 = vmatpush.msra.mxu0 0.0
    %1914 = vmatpush.msra.mxu0 0.0
    %1915 = vmatpush.msra.mxu0 0.0
    %1916 = vmatpush.msra.mxu0 0.0
    %1917 = vmatpush.msra.mxu0 0.0
    %1918 = vmatpush.msra.mxu0 0.0
    %1919 = vmatpush.msra.mxu0 0.0
    %1920 = vmatpush.msra.mxu0 0.0
    %1921 = vmatpush.msra.mxu0 0.0
    %1922 = vmatpush.msra.mxu0 0.0
    %1923 = vmatpush.msra.mxu0 0.0
    %1924 = vmatpush.msra.mxu0 0.0
    %1925 = vmatpush.msra.mxu0 %v925
    %1926 = vmatmul.f32.gmra.mxu0 %v1908
    %v1927 = vpop.f32.mrf.mxu0
    %v1928 = vadd.f32 0.0, %v1927
    %1929 = vdwg.mxu0
    %v1931 = vsel %vm982, %v1792, 0
    %1933 = vmatpush.msra.mxu0 0.0
    %1934 = vmatpush.msra.mxu0 0.0
    %1935 = vmatpush.msra.mxu0 0.0
    %1936 = vmatpush.msra.mxu0 0.0
    %1937 = vmatpush.msra.mxu0 0.0
    %1938 = vmatpush.msra.mxu0 0.0
    %1939 = vmatpush.msra.mxu0 0.0
    %1940 = vmatpush.msra.mxu0 0.0
    %1941 = vmatpush.msra.mxu0 0.0
    %1942 = vmatpush.msra.mxu0 0.0
    %1943 = vmatpush.msra.mxu0 0.0
    %1944 = vmatpush.msra.mxu0 0.0
    %1945 = vmatpush.msra.mxu0 0.0
    %1946 = vmatpush.msra.mxu0 0.0
    %1947 = vmatpush.msra.mxu0 0.0
    %1948 = vmatpush.msra.mxu0 %v975
    %1949 = vmatmul.f32.gmra.mxu0 %v1931
    %v1950 = vpop.f32.mrf.mxu0
    %v1951 = vadd.f32 0.0, %v1950
    %1952 = vdwg.mxu0
    %v1954 = vsel %vm982, %v1807, 0
    %1956 = vmatpush.msra.mxu0 0.0
    %1957 = vmatpush.msra.mxu0 0.0
    %1958 = vmatpush.msra.mxu0 0.0
    %1959 = vmatpush.msra.mxu0 0.0
    %1960 = vmatpush.msra.mxu0 0.0
    %1961 = vmatpush.msra.mxu0 0.0
    %1962 = vmatpush.msra.mxu0 0.0
    %1963 = vmatpush.msra.mxu0 0.0
    %1964 = vmatpush.msra.mxu0 0.0
    %1965 = vmatpush.msra.mxu0 0.0
    %1966 = vmatpush.msra.mxu0 0.0
    %1967 = vmatpush.msra.mxu0 0.0
    %1968 = vmatpush.msra.mxu0 0.0
    %1969 = vmatpush.msra.mxu0 0.0
    %1970 = vmatpush.msra.mxu0 0.0
    %1971 = vmatpush.msra.mxu0 %v977
    %1972 = vmatmul.f32.gmra.mxu0 %v1954
    %v1973 = vpop.f32.mrf.mxu0
    %v1974 = vadd.f32 0.0, %v1973
    %1975 = vdwg.mxu0
    %v1977 = vsel %vm982, %v1822, 0
    %1979 = vmatpush.msra.mxu0 0.0
    %1980 = vmatpush.msra.mxu0 0.0
    %1981 = vmatpush.msra.mxu0 0.0
    %1982 = vmatpush.msra.mxu0 0.0
    %1983 = vmatpush.msra.mxu0 0.0
    %1984 = vmatpush.msra.mxu0 0.0
    %1985 = vmatpush.msra.mxu0 0.0
    %1986 = vmatpush.msra.mxu0 0.0
    %1987 = vmatpush.msra.mxu0 0.0
    %1988 = vmatpush.msra.mxu0 0.0
    %1989 = vmatpush.msra.mxu0 0.0
    %1990 = vmatpush.msra.mxu0 0.0
    %1991 = vmatpush.msra.mxu0 0.0
    %1992 = vmatpush.msra.mxu0 0.0
    %1993 = vmatpush.msra.mxu0 0.0
    %1994 = vmatpush.msra.mxu0 %v979
    %1995 = vmatmul.f32.gmra.mxu0 %v1977
    %v1996 = vpop.f32.mrf.mxu0
    %v1997 = vadd.f32 0.0, %v1996
    %1998 = vdwg.mxu0
    %v2000 = vsel %vm982, %v1837, 0
    %2002 = vmatpush.msra.mxu0 0.0
    %2003 = vmatpush.msra.mxu0 0.0
    %2004 = vmatpush.msra.mxu0 0.0
    %2005 = vmatpush.msra.mxu0 0.0
    %2006 = vmatpush.msra.mxu0 0.0
    %2007 = vmatpush.msra.mxu0 0.0
    %2008 = vmatpush.msra.mxu0 0.0
    %2009 = vmatpush.msra.mxu0 0.0
    %2010 = vmatpush.msra.mxu0 0.0
    %2011 = vmatpush.msra.mxu0 0.0
    %2012 = vmatpush.msra.mxu0 0.0
    %2013 = vmatpush.msra.mxu0 0.0
    %2014 = vmatpush.msra.mxu0 0.0
    %2015 = vmatpush.msra.mxu0 0.0
    %2016 = vmatpush.msra.mxu0 0.0
    %2017 = vmatpush.msra.mxu0 %v981
    %2018 = vmatmul.f32.gmra.mxu0 %v2000
    %v2019 = vpop.f32.mrf.mxu0
    %v2020 = vadd.f32 0.0, %v2019
    %2021 = vdwg.mxu0
    %v2022 = vrot.slane %v1905, 4
    %v2023 = vsel %vm282, %v2022, %v1859
    %v2024 = vrot.slane %v1859, 4
    %v2025 = vsel %vm282, %v1905, %v2024
    %v2027 = vunpack.c.l.s4 1983009808
    %v2028 = vunpack.c.0.s8 %v2027
    %v2029 = vperm.slane %v2023, %v2028
    %v2031 = vunpack.c.l.s4 1983009808
    %v2032 = vunpack.c.0.s8 %v2031
    %v2033 = vperm.slane %v2025, %v2032
    %v2034 = vrot.slane %v1928, 4
    %v2035 = vsel %vm282, %v2034, %v1882
    %v2036 = vrot.slane %v1882, 4
    %v2037 = vsel %vm282, %v1928, %v2036
    %v2039 = vunpack.c.l.s4 1983009808
    %v2040 = vunpack.c.0.s8 %v2039
    %v2041 = vperm.slane %v2035, %v2040
    %v2043 = vunpack.c.l.s4 1983009808
    %v2044 = vunpack.c.0.s8 %v2043
    %v2045 = vperm.slane %v2037, %v2044
    %v2046 = vrot.slane %v2041, 4
    %v2047 = vsel %vm282, %v2046, %v2029
    %v2048 = vrot.slane %v2029, 4
    %v2049 = vsel %vm282, %v2041, %v2048
    %v2051 = vunpack.c.l.s4 1934713408
    %v2052 = vunpack.c.0.s8 %v2051
    %v2053 = vperm.slane %v2047, %v2052
    %v2055 = vunpack.c.l.s4 1934713408
    %v2056 = vunpack.c.0.s8 %v2055
    %v2057 = vperm.slane %v2049, %v2056
    %v2058 = vrot.slane %v2045, 4
    %v2059 = vsel %vm282, %v2058, %v2033
    %v2060 = vrot.slane %v2033, 4
    %v2061 = vsel %vm282, %v2045, %v2060
    %v2063 = vunpack.c.l.s4 1934713408
    %v2064 = vunpack.c.0.s8 %v2063
    %v2065 = vperm.slane %v2059, %v2064
    %v2067 = vunpack.c.l.s4 1934713408
    %v2068 = vunpack.c.0.s8 %v2067
    %v2069 = vperm.slane %v2061, %v2068
    %v2070 = vrot.slane %v2053, 4
    %v2071 = vsel %vm282, 0.0, %v2070
    %v2072 = vrot.slane %v2057, 4
    %v2073 = vsel %vm282, 0.0, %v2072
    %v2074 = vrot.slane %v2065, 4
    %v2075 = vsel %vm282, 0.0, %v2074
    %v2076 = vrot.slane %v2069, 4
    %v2077 = vsel %vm282, 0.0, %v2076
    %v2078 = vrot.slane %v1997, 4
    %v2079 = vsel %vm282, %v2078, %v1951
    %v2080 = vrot.slane %v1951, 4
    %v2081 = vsel %vm282, %v1997, %v2080
    %v2083 = vunpack.c.l.s4 1983009808
    %v2084 = vunpack.c.0.s8 %v2083
    %v2085 = vperm.slane %v2079, %v2084
    %v2087 = vunpack.c.l.s4 1983009808
    %v2088 = vunpack.c.0.s8 %v2087
    %v2089 = vperm.slane %v2081, %v2088
    %v2090 = vrot.slane %v2020, 4
    %v2091 = vsel %vm282, %v2090, %v1974
    %v2092 = vrot.slane %v1974, 4
    %v2093 = vsel %vm282, %v2020, %v2092
    %v2095 = vunpack.c.l.s4 1983009808
    %v2096 = vunpack.c.0.s8 %v2095
    %v2097 = vperm.slane %v2091, %v2096
    %v2099 = vunpack.c.l.s4 1983009808
    %v2100 = vunpack.c.0.s8 %v2099
    %v2101 = vperm.slane %v2093, %v2100
    %v2102 = vrot.slane %v2097, 4
    %v2103 = vsel %vm282, %v2102, %v2085
    %v2104 = vrot.slane %v2085, 4
    %v2105 = vsel %vm282, %v2097, %v2104
    %v2107 = vunpack.c.l.s4 1934713408
    %v2108 = vunpack.c.0.s8 %v2107
    %v2109 = vperm.slane %v2103, %v2108
    %v2111 = vunpack.c.l.s4 1934713408
    %v2112 = vunpack.c.0.s8 %v2111
    %v2113 = vperm.slane %v2105, %v2112
    %v2114 = vrot.slane %v2101, 4
    %v2115 = vsel %vm282, %v2114, %v2089
    %v2116 = vrot.slane %v2089, 4
    %v2117 = vsel %vm282, %v2101, %v2116
    %v2119 = vunpack.c.l.s4 1934713408
    %v2120 = vunpack.c.0.s8 %v2119
    %v2121 = vperm.slane %v2115, %v2120
    %v2123 = vunpack.c.l.s4 1934713408
    %v2124 = vunpack.c.0.s8 %v2123
    %v2125 = vperm.slane %v2117, %v2124
    %v2126 = vrot.slane %v2109, 4
    %v2127 = vsel %vm282, 0.0, %v2126
    %v2128 = vrot.slane %v2113, 4
    %v2129 = vsel %vm282, 0.0, %v2128
    %v2130 = vrot.slane %v2121, 4
    %v2131 = vsel %vm282, 0.0, %v2130
    %v2132 = vrot.slane %v2125, 4
    %v2133 = vsel %vm282, 0.0, %v2132
    %v2134 = vrot.slane %v2071, 4
    %v2135 = vsel %vm282, %v2134, %v2053
    %v2137 = vunpack.c.l.s4 1983009808
    %v2138 = vunpack.c.0.s8 %v2137
    %v2139 = vperm.slane %v2135, %v2138
    %v2140 = vrot.slane %v2127, 4
    %v2141 = vsel %vm282, %v2140, %v2109
    %v2143 = vunpack.c.l.s4 1983009808
    %v2144 = vunpack.c.0.s8 %v2143
    %v2145 = vperm.slane %v2141, %v2144
    %v2146 = vrot.slane %v2073, 4
    %v2147 = vsel %vm282, %v2146, %v2057
    %v2149 = vunpack.c.l.s4 1983009808
    %v2150 = vunpack.c.0.s8 %v2149
    %v2151 = vperm.slane %v2147, %v2150
    %v2152 = vrot.slane %v2129, 4
    %v2153 = vsel %vm282, %v2152, %v2113
    %v2155 = vunpack.c.l.s4 1983009808
    %v2156 = vunpack.c.0.s8 %v2155
    %v2157 = vperm.slane %v2153, %v2156
    %v2158 = vrot.slane %v2145, 4
    %v2159 = vsel %vm282, %v2158, %v2139
    %v2160 = vrot.slane %v2139, 4
    %v2161 = vsel %vm282, %v2145, %v2160
    %v2163 = vunpack.c.l.s4 1934713408
    %v2164 = vunpack.c.0.s8 %v2163
    %v2165 = vperm.slane %v2159, %v2164
    %v2167 = vunpack.c.l.s4 1934713408
    %v2168 = vunpack.c.0.s8 %v2167
    %v2169 = vperm.slane %v2161, %v2168
    %v2170 = vrot.slane %v2157, 4
    %v2171 = vsel %vm282, %v2170, %v2151
    %v2172 = vrot.slane %v2151, 4
    %v2173 = vsel %vm282, %v2157, %v2172
    %v2175 = vunpack.c.l.s4 1934713408
    %v2176 = vunpack.c.0.s8 %v2175
    %v2177 = vperm.slane %v2171, %v2176
    %v2179 = vunpack.c.l.s4 1934713408
    %v2180 = vunpack.c.0.s8 %v2179
    %v2181 = vperm.slane %v2173, %v2180
    %v2182 = vrot.slane %v2177, 4
    %v2183 = vsel %vm282, %v2182, %v2165
    %v2184 = vrot.slane %v2165, 4
    %v2185 = vsel %vm282, %v2177, %v2184
    %v2186 = vrot.slane %v2181, 4
    %v2187 = vsel %vm282, %v2186, %v2169
    %v2188 = vrot.slane %v2169, 4
    %v2189 = vsel %vm282, %v2181, %v2188
    %v2190 = vrot.slane %v2075, 4
    %v2191 = vsel %vm282, %v2190, %v2065
    %v2193 = vunpack.c.l.s4 1983009808
    %v2194 = vunpack.c.0.s8 %v2193
    %v2195 = vperm.slane %v2191, %v2194
    %v2196 = vrot.slane %v2131, 4
    %v2197 = vsel %vm282, %v2196, %v2121
    %v2199 = vunpack.c.l.s4 1983009808
    %v2200 = vunpack.c.0.s8 %v2199
    %v2201 = vperm.slane %v2197, %v2200
    %v2202 = vrot.slane %v2077, 4
    %v2203 = vsel %vm282, %v2202, %v2069
    %v2205 = vunpack.c.l.s4 1983009808
    %v2206 = vunpack.c.0.s8 %v2205
    %v2207 = vperm.slane %v2203, %v2206
    %v2208 = vrot.slane %v2133, 4
    %v2209 = vsel %vm282, %v2208, %v2125
    %v2211 = vunpack.c.l.s4 1983009808
    %v2212 = vunpack.c.0.s8 %v2211
    %v2213 = vperm.slane %v2209, %v2212
    %v2214 = vrot.slane %v2201, 4
    %v2215 = vsel %vm282, %v2214, %v2195
    %v2216 = vrot.slane %v2195, 4
    %v2217 = vsel %vm282, %v2201, %v2216
    %v2219 = vunpack.c.l.s4 1934713408
    %v2220 = vunpack.c.0.s8 %v2219
    %v2221 = vperm.slane %v2215, %v2220
    %v2223 = vunpack.c.l.s4 1934713408
    %v2224 = vunpack.c.0.s8 %v2223
    %v2225 = vperm.slane %v2217, %v2224
    %v2226 = vrot.slane %v2213, 4
    %v2227 = vsel %vm282, %v2226, %v2207
    %v2228 = vrot.slane %v2207, 4
    %v2229 = vsel %vm282, %v2213, %v2228
    %v2231 = vunpack.c.l.s4 1934713408
    %v2232 = vunpack.c.0.s8 %v2231
    %v2233 = vperm.slane %v2227, %v2232
    %v2235 = vunpack.c.l.s4 1934713408
    %v2236 = vunpack.c.0.s8 %v2235
    %v2237 = vperm.slane %v2229, %v2236
    %v2238 = vrot.slane %v2233, 4
    %v2239 = vsel %vm282, %v2238, %v2221
    %v2240 = vrot.slane %v2221, 4
    %v2241 = vsel %vm282, %v2233, %v2240
    %v2242 = vrot.slane %v2237, 4
    %v2243 = vsel %vm282, %v2242, %v2225
    %v2244 = vrot.slane %v2225, 4
    %v2245 = vsel %vm282, %v2237, %v2244
    %2248 = vrot.lane.b32.xlu0 %v2185, 8
    %v2249 = vpop.permute.xlu0 %2248
    %2250 = vrot.lane.b32.xlu0 %v2241, 8
    %v2251 = vpop.permute.xlu0 %2250
    %2256 = vrot.lane.b32.xlu0 %v2187, 16
    %v2257 = vpop.permute.xlu0 %2256
    %2258 = vrot.lane.b32.xlu0 %v2243, 16
    %v2259 = vpop.permute.xlu0 %2258
    %2264 = vrot.lane.b32.xlu0 %v2189, 24
    %v2265 = vpop.permute.xlu0 %2264
    %2266 = vrot.lane.b32.xlu0 %v2245, 24
    %v2267 = vpop.permute.xlu0 %2266
    %v2270 = vsel %vm982, %v2183, %v2249
    %v2271 = vsel %vm982, %v2239, %v2251
    %vm2272 = vcmask 130048
    %v2273 = vsel %vm2272, %v2270, %v2257
    %v2274 = vsel %vm2272, %v2271, %v2259
    %vm2275 = vcmask 195584
    %v2276 = vsel %vm2275, %v2273, %v2265
    %v2277 = vsel %vm2275, %v2274, %v2267
    %v2278 = vld [vmem:[#allocation13] sm:$0xff]
    %v2279 = vld [vmem:[#allocation13 + $0x8] sm:$0xff]
    %v2280 = vld [vmem:[#allocation13 + $0x10] sm:$0xff]
    %v2281 = vld [vmem:[#allocation13 + $0x18] sm:$0xff]
    %v2283 = vsel %vm161, %v2276, 0
    %v2286 = vsel %vm161, %v2277, 0
    %2288 = vmatpush.msra.mxu0 0.0
    %2289 = vmatpush.msra.mxu0 0.0
    %2290 = vmatpush.msra.mxu0 0.0
    %2291 = vmatpush.msra.mxu0 0.0
    %2292 = vmatpush.msra.mxu0 0.0
    %2293 = vmatpush.msra.mxu0 0.0
    %2294 = vmatpush.msra.mxu0 0.0
    %2295 = vmatpush.msra.mxu0 0.0
    %2296 = vmatpush.msra.mxu0 0.0
    %2297 = vmatpush.msra.mxu0 0.0
    %2298 = vmatpush.msra.mxu0 0.0
    %2299 = vmatpush.msra.mxu0 0.0
    %2300 = vmatpush.msra.mxu0 %v2281
    %2301 = vmatpush.msra.mxu0 %v2280
    %2302 = vmatpush.msra.mxu0 %v2279
    %2303 = vmatpush.msra.mxu0 %v2278
    %2304 = vmatmul.f32.gmra.mxu0 %v2283
    %v2305 = vpop.f32.mrf.mxu0
    %v2306 = vadd.f32 0.0, %v2305
    %2307 = vmatmul.f32.gmra.mxu0 %v2286
    %v2308 = vpop.f32.mrf.mxu0
    %v2309 = vadd.f32 0.0, %v2308
    %2310 = vdwg.mxu0
    %2311 = vst.msk [vmem:[#allocation16] sm:$0xff] %vm161, %v2306
    %2312 = vst.msk [vmem:[#allocation16 + $0x8] sm:$0xff] %vm161, %v2309
    // Predicated region
    $region66: #{tpu_custom_call.1} parent=1 // pred_check
      _
    $region67: #{tpu_custom_call.1} parent=1 // pred_check_branch
      %2314 = sbr.rel (0) target = $region69
    $region68: #{tpu_custom_call.1} parent=1 // pred_region
      %2316 = vsyncadd [#allocation4], 0
      %s2317 = sshll.u32 [#allocation16], 4
      %s2318 = int_to_ptr.vmem [resolvable:$true] %s2317
      %s2319 = sshll.u32 %s8, 4
      %s2320 = int_to_ptr.hbm [resolvable:$true] %s2319
      %2325 = dma.vmem_to_hbm [thread:$0]  %s2318, 256, %s2320, [#allocation4], 128, 128, 8
    $region69: #{tpu_custom_call.1} parent=1 // pred_fallthru
      _
    // Predicated region
    $region70: #{tpu_custom_call.1} parent=1 // pred_check
      _
    $region71: #{tpu_custom_call.1} parent=1 // pred_check_branch
      %2327 = sbr.rel (0) target = $region73
    $region72: #{tpu_custom_call.1} parent=1 // pred_region
      %2329 = dma.done [#allocation4], 256
    $region73: #{tpu_custom_call.1} parent=1 // pred_fallthru
      _
    %2330 = vsyncpa [#allocation3], 1
    %2331 = vsyncpa [#allocation6], 1
    %2332 = vsyncpa [#allocation9], 1
    %2333 = vsyncpa [#allocation12], 1
    %2334 = vsyncpa [#allocation15], 1
    %2335 = vsyncpa [#allocation4], 1

</llo_original>
